<compile_context>
chip_gen: v5e
topology: v5e:2x2
jax: 0.10.0
libtpu: 0.0.40
codegen_flags: <defaults>
</compile_context>

<pallas_src>
import jax
import jax.numpy as jnp
import numpy as np
from jax import lax
from jax.experimental import pallas as pl
from jax.experimental.pallas import tpu as pltpu


# ---------------------------------------------------------------------------
# Host-side (one-time) weight packing — run OUTSIDE jit.
# ---------------------------------------------------------------------------
def _build_blockdiag_deconv_weight(up_w, W2):
    """ConvTranspose2d(k=2, s=2) as one matmul on (rows, W2*Cin2) slabs.

    BD[j*Cin2 + d, dh*(W*Cup) + (2*j+dw)*Cup + co] = up_w[d, co, dh, dw]
    =>  (x2_row @ BD)[dh*W*Cup + w*Cup + co] = deconv_row(2*h2 + dh)[w, co]
    """
    up_w = np.asarray(up_w, np.float32)              # (Cin2, Cup, 2, 2)
    Cin2, Cup = up_w.shape[0], up_w.shape[1]
    W = 2 * W2
    bd = np.zeros((W2 * Cin2, 2 * W * Cup), np.float32)
    for j in range(W2):
        for dh in range(2):
            for dw in range(2):
                col = dh * (W * Cup) + (2 * j + dw) * Cup
                bd[j * Cin2:(j + 1) * Cin2, col:col + Cup] = up_w[:, :, dh, dw]
    return bd


def _build_band_weight(w_hwio, W, cbase, cb):
    """Per-dh banded (Toeplitz) weight for a 3x3/pad-1 conv on UNPADDED rows.

    band[dh, xw*cb + c, wo*cout + m] = w[dh, xw-wo+1, cbase+c, m]  (|xw-wo|<=1)
    =>  out[h, wo, m] = sum_dh row(h+dh-1) @ band[dh]   (rows -1 / H are zero)
    """
    w = np.asarray(w_hwio, np.float32)               # (3, 3, Cin, Cout)
    assert w.shape[0] == 3 and w.shape[1] == 3
    cout = w.shape[-1]
    band = np.zeros((3, W * cb, W * cout), np.float32)
    for dh in range(3):
        for wo in range(W):
            for dw in range(3):
                xw = wo + dw - 1
                if 0 <= xw < W:
                    band[dh, xw * cb:(xw + 1) * cb, wo * cout:(wo + 1) * cout] = \
                        w[dh, dw, cbase:cbase + cb, :]
    return band


def pack_unet_up_c_params(params, inputs1_shape, inputs2_shape):
    """One-time packing of the PyTorch-layout parameters into MXU-ready form."""
    _, C1, _, _ = inputs1_shape
    _, Cin2, H2, W2 = inputs2_shape
    W = 2 * W2
    up_w = np.asarray(params["up_w"], np.float32)    # (Cin2, Cup, 2, 2)
    up_b = np.asarray(params["up_b"], np.float32)
    w1 = np.asarray(params["w1"], np.float32)        # HWIO (3, 3, C1+Cup, Cmid)
    b1 = np.asarray(params["b1"], np.float32)
    w2 = np.asarray(params["w2"], np.float32)        # HWIO (3, 3, Cmid, Cout)
    b2 = np.asarray(params["b2"], np.float32)
    Cup = up_w.shape[1]
    assert w1.shape[2] == C1 + Cup, "conv1 Cin must equal C(inputs1) + C(up)"
    # bf16 MXU operands (f32 accumulation in-kernel); biases stay f32.
    return dict(
        bdw=jnp.asarray(_build_blockdiag_deconv_weight(up_w, W2), jnp.bfloat16),
        upb=jnp.asarray(np.tile(up_b, W)[None, :], jnp.float32),          # (1, W*Cup)
        w1x=jnp.asarray(_build_band_weight(w1, W, 0, C1), jnp.bfloat16),
        w1u=jnp.asarray(_build_band_weight(w1, W, C1, Cup), jnp.bfloat16),
        b1t=jnp.asarray(np.tile(b1, W)[None, :], jnp.float32),            # (1, W*Cmid)
        w2b=jnp.asarray(_build_band_weight(w2, W, 0, w2.shape[2]), jnp.bfloat16),
        b2t=jnp.asarray(np.tile(b2, W)[None, :], jnp.float32),            # (1, W*Cout)
    )


# ---------------------------------------------------------------------------
# Fused Pallas kernel: deconv + pad + concat + conv1 + ReLU + conv2 + ReLU
# ---------------------------------------------------------------------------
def _make_fused_kernel(B, H, W, C1, Cup, Cmid, Cout, h1s, w1s, py0, px0):
    bf16, f32 = jnp.bfloat16, jnp.float32
    BH = B * H
    WCu, WCm, WCo = W * Cup, W * Cmid, W * Cout

    def band_conv(pad_ref, w_ref):
        """3x3/pad-1 conv as 3 accumulating MXU dots over dh-shifted rows."""
        acc = None
        for dh in range(3):
            lhs = pad_ref[:, dh:dh + H, :].reshape(BH, -1)          # bf16
            t = jnp.dot(lhs, w_ref[dh], preferred_element_type=f32)
            acc = t if acc is None else acc + t
        return acc

    def kernel(x1_ref, x2_ref, bdw_ref, upb_ref, w1x_ref, w1u_ref, b1t_ref,
               w2b_ref, b2t_ref, o_ref, x1_pad, up_pad, h1_pad):
        # ---- 1) ConvTranspose2d(k=2, s=2): one MXU matmul, no scatter -------
        # x2 rows were duplicated (each row twice) in the wrapper, so the dot
        # has M = B*H rows; row h holds both 2x2-kernel-row results and a
        # row-parity select picks the right one.  One lane-dense interior
        # store replaces the old 2*H2 single-row masked stores.
        dec = jnp.dot(x2_ref[...].reshape(BH, -1), bdw_ref[...],
                      preferred_element_type=f32)                  # (BH, 2*W*Cup)
        par = lax.broadcasted_iota(jnp.int32, (BH, WCu), 0) % 2
        up_rows = jnp.where(par == 1, dec[:, WCu:], dec[:, :WCu]) + upb_ref[...]

        zu = jnp.zeros((B, 1, WCu), bf16)
        up_pad[:, 0:1, :] = zu                        # height halo (conv pad=1)
        up_pad[:, H + 1:H + 2, :] = zu
        up_pad[:, 1:H + 1, :] = up_rows.reshape(B, H, WCu).astype(bf16)

        # ---- 2) F.pad(inputs1): zero frame + one sub-block store ------------
        # Zeroed every step (not hoisted behind program_id==0) so correctness
        # holds when the "parallel" grid axis is split across the v7x
        # megacore; the buffer is tiny bf16 so this is noise.
        x1_pad[...] = jnp.zeros(x1_pad.shape, bf16)
        x1_pad[:, 1 + py0:1 + py0 + h1s, px0 * C1:(px0 + w1s) * C1] = x1_ref[...]

        # ---- 3) conv1(cat([x1, up])) + bias + ReLU: 6 accumulating dots -----
        # The channel concat never materializes: w1 is pre-split along Cin and
        # the two sources are separate banded-weight operands.
        h1 = jnp.maximum(band_conv(x1_pad, w1x_ref) + band_conv(up_pad, w1u_ref)
                         + b1t_ref[...], 0.0)                      # (BH, W*Cmid)

        zm = jnp.zeros((B, 1, WCm), bf16)
        h1_pad[:, 0:1, :] = zm
        h1_pad[:, H + 1:H + 2, :] = zm
        h1_pad[:, 1:H + 1, :] = h1.reshape(B, H, WCm).astype(bf16)

        # ---- 4) conv2 + bias + ReLU: 3 accumulating dots, lane-dense store --
        o = jnp.maximum(band_conv(h1_pad, w2b_ref) + b2t_ref[...], 0.0)
        o_ref[...] = o.reshape(B, H, WCo)

    return kernel


def unet_up_c_forward(inputs1_nchw, inputs2_nchw, packed, block_batch=None):
    """unetUpC.forward (is_deconv=True): one fused Pallas call, grid over
    batch blocks (batch folded into the MXU M dimension)."""
    N, C1, h1s, w1s = inputs1_nchw.shape
    _, Cin2, H2, W2 = inputs2_nchw.shape
    H, W = 2 * H2, 2 * W2
    off_y, off_x = H - h1s, W - w1s
    assert off_y >= 0 and off_x >= 0, "inputs1 larger than upsampled inputs2"
    py0, px0 = off_y // 2, off_x // 2      # F.pad([offX//2, offX-offX//2, ...])
    Cup = packed["upb"].shape[1] // W
    Cmid = packed["b1t"].shape[1] // W
    Cout = packed["b2t"].shape[1] // W

    # Batch block: fill the MXU M dimension (~128 sublanes) but keep >= 2 grid
    # steps when N >= 2 so the v7x megacore's second core gets work.
    if block_batch is None:
        block_batch = max(1, min(max(1, 128 // H), N if N == 1 else max(1, N // 2)))
    B = int(block_batch)
    n_steps = -(-N // B)
    Npad = n_steps * B

    # NCHW -> NHWC -> per-image 2-D row layout (row = h, lanes = w*C + c),
    # cast to bf16 (halves input DMA).  x2 rows are duplicated so the deconv
    # matmul has one row per OUTPUT row (see kernel step 1).
    x1 = jnp.transpose(inputs1_nchw, (0, 2, 3, 1)).reshape(N, h1s, w1s * C1)
    x1 = x1.astype(jnp.bfloat16)
    x2 = jnp.transpose(inputs2_nchw, (0, 2, 3, 1)).reshape(N, H2, W2 * Cin2)
    x2 = jnp.repeat(x2, 2, axis=1).astype(jnp.bfloat16)            # (N, H, W2*Cin2)
    if Npad != N:
        x1 = jnp.pad(x1, ((0, Npad - N), (0, 0), (0, 0)))
        x2 = jnp.pad(x2, ((0, Npad - N), (0, 0), (0, 0)))

    kernel = _make_fused_kernel(B, H, W, C1, Cup, Cmid, Cout, h1s, w1s, py0, px0)

    out2d = pl.pallas_call(
        kernel,
        out_shape=jax.ShapeDtypeStruct((Npad, H, W * Cout), jnp.float32),
        grid=(n_steps,),
        in_specs=[
            pl.BlockSpec((B, h1s, w1s * C1), lambda n: (n, 0, 0)),
            pl.BlockSpec((B, H, W2 * Cin2), lambda n: (n, 0, 0)),
            pl.BlockSpec(packed["bdw"].shape, lambda n: (0, 0)),
            pl.BlockSpec(packed["upb"].shape, lambda n: (0, 0)),
            pl.BlockSpec(packed["w1x"].shape, lambda n: (0, 0, 0)),
            pl.BlockSpec(packed["w1u"].shape, lambda n: (0, 0, 0)),
            pl.BlockSpec(packed["b1t"].shape, lambda n: (0, 0)),
            pl.BlockSpec(packed["w2b"].shape, lambda n: (0, 0, 0)),
            pl.BlockSpec(packed["b2t"].shape, lambda n: (0, 0)),
        ],
        out_specs=pl.BlockSpec((B, H, W * Cout), lambda n: (n, 0, 0)),
        scratch_shapes=[
            pltpu.VMEM((B, H + 2, W * C1), jnp.bfloat16),    # F.pad(inputs1)
            pltpu.VMEM((B, H + 2, W * Cup), jnp.bfloat16),   # deconv out + halo
            pltpu.VMEM((B, H + 2, W * Cmid), jnp.bfloat16),  # conv1 out + halo
        ],
        compiler_params=pltpu.CompilerParams(
            dimension_semantics=("parallel",)),
    )(x1, x2, packed["bdw"], packed["upb"], packed["w1x"], packed["w1u"],
      packed["b1t"], packed["w2b"], packed["b2t"])

    # (N, H, W*Cout) is already NHWC memory order; only a small transpose back
    # to the module's NCHW interface remains in XLA.
    out = out2d[:N].reshape(N, H, W, Cout)
    return jnp.transpose(out, (0, 3, 1, 2))


# ---------------------------------------------------------------------------
# Precision-matched pure-JAX reference (bf16 matmul operands, f32 accumulate)
# ---------------------------------------------------------------------------
def _ref_forward(x1_nchw, x2_nchw, p):
    bf16, f32 = jnp.bfloat16, jnp.float32
    x1 = jnp.transpose(x1_nchw, (0, 2, 3, 1)).astype(f32)
    x2 = jnp.transpose(x2_nchw, (0, 2, 3, 1)).astype(f32)
    N, H2, W2, _ = x2.shape
    Cup = p["up_w"].shape[1]
    up = jnp.einsum("nijc,cokl->nikjlo", x2.astype(bf16), p["up_w"].astype(bf16),
                    preferred_element_type=f32).reshape(N, 2 * H2, 2 * W2, Cup)
    up = up + p["up_b"]
    off_y = up.shape[1] - x1.shape[1]
    off_x = up.shape[2] - x1.shape[2]
    x1p = jnp.pad(x1, ((0, 0), (off_y // 2, off_y - off_y // 2),
                       (off_x // 2, off_x - off_x // 2), (0, 0)))
    cat = jnp.concatenate([x1p, up], axis=-1)

    def conv(x, w, b):
        y = jax.lax.conv_general_dilated(
            x.astype(bf16), w.astype(bf16), (1, 1), "SAME",
            dimension_numbers=("NHWC", "HWIO", "NHWC"),
            preferred_element_type=f32)
        return jnp.maximum(y + b, 0.0)

    h = conv(cat, p["w1"], p["b1"])
    h = conv(h, p["w2"], p["b2"])
    return jnp.transpose(h, (0, 3, 1, 2))


# ---------------------------------------------------------------------------
if __name__ == "__main__":
    in_size, out_size, N = 8, 4, 2
    key = jax.random.PRNGKey(0)
    k1, k2, k3, k4, k5, k6, k7, k8 = jax.random.split(key, 8)

    # Parameter shapes exactly as the PyTorch module implies:
    #   up:    ConvTranspose2d(in_size*2, out_size, 2, 2) -> W (16, 4, 2, 2)
    #   conv1: Conv2d(in_size,  out_size, 3, 1, 1)        -> W (4, 8, 3, 3)
    #   conv2: Conv2d(out_size, out_size, 3, 1, 1)        -> W (4, 4, 3, 3)
    up_w = 0.1 * jax.random.normal(k1, (2 * in_size, out_size, 2, 2), jnp.float32)
    up_b = 0.1 * jax.random.normal(k2, (out_size,), jnp.float32)
    w1_oihw = 0.1 * jax.random.normal(k3, (out_size, in_size, 3, 3), jnp.float32)
    b1 = 0.1 * jax.random.normal(k4, (out_size,), jnp.float32)
    w2_oihw = 0.1 * jax.random.normal(k5, (out_size, out_size, 3, 3), jnp.float32)
    b2 = 0.1 * jax.random.normal(k6, (out_size,), jnp.float32)

    params = dict(
        up_w=up_w, up_b=up_b,
        w1=jnp.transpose(w1_oihw, (2, 3, 1, 0)), b1=b1,   # OIHW -> HWIO
        w2=jnp.transpose(w2_oihw, (2, 3, 1, 0)), b2=b2,
    )

    # inputs1 channels = in_size - out_size so the concat has in_size channels.
    inputs1 = jax.random.normal(k7, (N, in_size - out_size, 14, 14), jnp.float32)
    inputs2 = jax.random.normal(k8, (N, 2 * in_size, 8, 8), jnp.float32)

    packed = pack_unet_up_c_params(params, inputs1.shape, inputs2.shape)
    fwd = jax.jit(unet_up_c_forward)
    out = jax.block_until_ready(fwd(inputs1, inputs2, packed))

    ref = _ref_forward(inputs1, inputs2, params)
    assert out.shape == (N, out_size, 16, 16), out.shape
    max_err = float(np.max(np.abs(np.asarray(out) - np.asarray(ref))))
    assert np.allclose(np.asarray(out), np.asarray(ref),
                       rtol=2e-3, atol=2e-3), max_err

    print("KERNEL_OK")
</pallas_src>

<mosaic_0001>
module attributes {stable_mosaic.version = 11 : i64} {
  func.func @kernel(%arg0: i32, %arg1: memref<1x14x56xbf16, #tpu.memory_space<vmem>>, %arg2: memref<1x16x128xbf16, #tpu.memory_space<vmem>>, %arg3: memref<128x128xbf16, #tpu.memory_space<vmem>>, %arg4: memref<1x64xf32, #tpu.memory_space<vmem>>, %arg5: memref<3x64x64xbf16, #tpu.memory_space<vmem>>, %arg6: memref<3x64x64xbf16, #tpu.memory_space<vmem>>, %arg7: memref<1x64xf32, #tpu.memory_space<vmem>>, %arg8: memref<3x64x64xbf16, #tpu.memory_space<vmem>>, %arg9: memref<1x64xf32, #tpu.memory_space<vmem>>, %arg10: memref<1x16x64xf32, #tpu.memory_space<vmem>>, %arg11: memref<1x18x64xbf16, #tpu.memory_space<vmem>>, %arg12: memref<1x18x64xbf16, #tpu.memory_space<vmem>>, %arg13: memref<1x18x64xbf16, #tpu.memory_space<vmem>>) attributes {dimension_semantics = [#tpu.dimension_semantics<parallel>], iteration_bounds = array<i64: 2>, scalar_prefetch = 0 : i64, scratch_operands = 3 : i64, tpu.core_type = #tpu.core_type<tc>, window_params = [{transform_indices = @transform_0, window_bounds = array<i64: 1, 14, 56>}, {transform_indices = @transform_1, window_bounds = array<i64: 1, 16, 128>}, {pipeline_mode = #tpu.pipeline_mode<synchronous>, transform_indices = @transform_2, window_bounds = array<i64: 128, 128>}, {pipeline_mode = #tpu.pipeline_mode<synchronous>, transform_indices = @transform_3, window_bounds = array<i64: 1, 64>}, {pipeline_mode = #tpu.pipeline_mode<synchronous>, transform_indices = @transform_4, window_bounds = array<i64: 3, 64, 64>}, {pipeline_mode = #tpu.pipeline_mode<synchronous>, transform_indices = @transform_5, window_bounds = array<i64: 3, 64, 64>}, {pipeline_mode = #tpu.pipeline_mode<synchronous>, transform_indices = @transform_6, window_bounds = array<i64: 1, 64>}, {pipeline_mode = #tpu.pipeline_mode<synchronous>, transform_indices = @transform_7, window_bounds = array<i64: 3, 64, 64>}, {pipeline_mode = #tpu.pipeline_mode<synchronous>, transform_indices = @transform_8, window_bounds = array<i64: 1, 64>}, {transform_indices = @transform_9, window_bounds = array<i64: 1, 16, 64>}]} {
    %c0 = arith.constant 0 : index
    %c0_0 = arith.constant 0 : index
    %c0_1 = arith.constant 0 : index
    %0 = vector.load %arg2[%c0, %c0_0, %c0_1] : memref<1x16x128xbf16, #tpu.memory_space<vmem>>, vector<1x16x128xbf16>
    %1 = vector.shape_cast %0 : vector<1x16x128xbf16> to vector<16x128xbf16>
    %c0_2 = arith.constant 0 : index
    %c0_3 = arith.constant 0 : index
    %2 = vector.load %arg3[%c0_2, %c0_3] : memref<128x128xbf16, #tpu.memory_space<vmem>>, vector<128x128xbf16>
    %cst = arith.constant dense<0.000000e+00> : vector<16x128xf32>
    %3 = tpu.matmul %1, %2, %cst {dimension_numbers = #tpu.dot_dimension_numbers<[1], [0], [0], [1], [0, 0, 1, 1], [], []>} : vector<16x128xbf16>, vector<128x128xbf16>, vector<16x128xf32> -> vector<16x128xf32>
    %4 = tpu.iota {dimensions = array<i32: 0>} : vector<16x64xi32>
    %c2_i32 = arith.constant 2 : i32
    %c0_i32 = arith.constant 0 : i32
    %5 = arith.cmpi eq, %c2_i32, %c0_i32 : i32
    %c1_i32 = arith.constant 1 : i32
    %6 = arith.select %5, %c1_i32, %c2_i32 : i32
    %7 = vector.broadcast %6 : i32 to vector<16x64xi32>
    %8 = arith.remsi %4, %7 : vector<16x64xi32>
    %c0_i32_4 = arith.constant 0 : i32
    %9 = vector.broadcast %c0_i32_4 : i32 to vector<16x64xi32>
    %10 = arith.cmpi ne, %8, %9 : vector<16x64xi32>
    %c0_i32_5 = arith.constant 0 : i32
    %11 = vector.broadcast %c0_i32_5 : i32 to vector<16x64xi32>
    %12 = arith.cmpi slt, %8, %11 : vector<16x64xi32>
    %c0_i32_6 = arith.constant 0 : i32
    %13 = arith.cmpi slt, %6, %c0_i32_6 : i32
    %14 = vector.broadcast %13 : i1 to vector<16x64xi1>
    %15 = vector.broadcast %14 : vector<16x64xi1> to vector<16x64xi1>
    %16 = arith.xori %12, %15 : vector<16x64xi1>
    %17 = arith.andi %16, %10 : vector<16x64xi1>
    %18 = vector.broadcast %6 : i32 to vector<16x64xi32>
    %19 = arith.addi %8, %18 : vector<16x64xi32>
    %20 = arith.select %17, %19, %8 : vector<16x64xi1>, vector<16x64xi32>
    %c1_i32_7 = arith.constant 1 : i32
    %21 = vector.broadcast %c1_i32_7 : i32 to vector<16x64xi32>
    %22 = arith.cmpi eq, %20, %21 : vector<16x64xi32>
    %23 = vector.extract_strided_slice %3 {offsets = [0, 64], sizes = [16, 64], strides = [1, 1]} : vector<16x128xf32> to vector<16x64xf32>
    %24 = vector.extract_strided_slice %3 {offsets = [0, 0], sizes = [16, 64], strides = [1, 1]} : vector<16x128xf32> to vector<16x64xf32>
    %25 = arith.select %22, %23, %24 : vector<16x64xi1>, vector<16x64xf32>
    %c0_8 = arith.constant 0 : index
    %c0_9 = arith.constant 0 : index
    %26 = vector.load %arg4[%c0_8, %c0_9] : memref<1x64xf32, #tpu.memory_space<vmem>>, vector<1x64xf32>
    %27 = vector.broadcast %26 : vector<1x64xf32> to vector<16x64xf32>
    %28 = arith.addf %25, %27 : vector<16x64xf32>
    %cst_10 = arith.constant 0.000000e+00 : bf16
    %29 = vector.broadcast %cst_10 : bf16 to vector<1x1x64xbf16>
    %c0_11 = arith.constant 0 : index
    %c0_12 = arith.constant 0 : index
    %c0_13 = arith.constant 0 : index
    %30 = vector.load %arg12[%c0_11, %c0_12, %c0_13] : memref<1x18x64xbf16, #tpu.memory_space<vmem>>, vector<1x1x64xbf16>
    tpu.vector_store %arg12[%c0_11, %c0_12, %c0_13], %29 {strides = array<i32>} : memref<1x18x64xbf16, #tpu.memory_space<vmem>>, vector<1x1x64xbf16>,
    %c0_14 = arith.constant 0 : index
    %c17 = arith.constant 17 : index
    %c0_15 = arith.constant 0 : index
    %31 = vector.load %arg12[%c0_14, %c17, %c0_15] : memref<1x18x64xbf16, #tpu.memory_space<vmem>>, vector<1x1x64xbf16>
    tpu.vector_store %arg12[%c0_14, %c17, %c0_15], %29 {strides = array<i32>} : memref<1x18x64xbf16, #tpu.memory_space<vmem>>, vector<1x1x64xbf16>,
    %32 = vector.shape_cast %28 : vector<16x64xf32> to vector<1x16x64xf32>
    %33 = arith.truncf %32 : vector<1x16x64xf32> to vector<1x16x64xbf16>
    %c0_16 = arith.constant 0 : index
    %c1 = arith.constant 1 : index
    %c0_17 = arith.constant 0 : index
    %34 = vector.load %arg12[%c0_16, %c1, %c0_17] : memref<1x18x64xbf16, #tpu.memory_space<vmem>>, vector<1x16x64xbf16>
    tpu.vector_store %arg12[%c0_16, %c1, %c0_17], %33 {strides = array<i32>} : memref<1x18x64xbf16, #tpu.memory_space<vmem>>, vector<1x16x64xbf16>,
    %cst_18 = arith.constant 0.000000e+00 : bf16
    %35 = vector.broadcast %cst_18 : bf16 to vector<1x18x64xbf16>
    %c0_19 = arith.constant 0 : index
    %c0_20 = arith.constant 0 : index
    %c0_21 = arith.constant 0 : index
    %36 = vector.load %arg11[%c0_19, %c0_20, %c0_21] : memref<1x18x64xbf16, #tpu.memory_space<vmem>>, vector<1x18x64xbf16>
    tpu.vector_store %arg11[%c0_19, %c0_20, %c0_21], %35 {strides = array<i32>} : memref<1x18x64xbf16, #tpu.memory_space<vmem>>, vector<1x18x64xbf16>,
    %c0_22 = arith.constant 0 : index
    %c0_23 = arith.constant 0 : index
    %c0_24 = arith.constant 0 : index
    %37 = vector.load %arg1[%c0_22, %c0_23, %c0_24] : memref<1x14x56xbf16, #tpu.memory_space<vmem>>, vector<1x14x56xbf16>
    %c0_25 = arith.constant 0 : index
    %c2 = arith.constant 2 : index
    %c4 = arith.constant 4 : index
    %38 = vector.load %arg11[%c0_25, %c2, %c4] : memref<1x18x64xbf16, #tpu.memory_space<vmem>>, vector<1x14x56xbf16>
    tpu.vector_store %arg11[%c0_25, %c2, %c4], %37 {strides = array<i32>} : memref<1x18x64xbf16, #tpu.memory_space<vmem>>, vector<1x14x56xbf16>,
    %c0_26 = arith.constant 0 : index
    %c0_27 = arith.constant 0 : index
    %c0_28 = arith.constant 0 : index
    %39 = vector.load %arg11[%c0_26, %c0_27, %c0_28] : memref<1x18x64xbf16, #tpu.memory_space<vmem>>, vector<1x16x64xbf16>
    %40 = vector.shape_cast %39 : vector<1x16x64xbf16> to vector<16x64xbf16>
    %c0_29 = arith.constant 0 : index
    %c0_30 = arith.constant 0 : index
    %c0_31 = arith.constant 0 : index
    %41 = vector.load %arg5[%c0_29, %c0_30, %c0_31] : memref<3x64x64xbf16, #tpu.memory_space<vmem>>, vector<1x64x64xbf16>
    %42 = vector.shape_cast %41 : vector<1x64x64xbf16> to vector<64x64xbf16>
    %cst_32 = arith.constant dense<0.000000e+00> : vector<16x64xf32>
    %43 = tpu.matmul %40, %42, %cst_32 {dimension_numbers = #tpu.dot_dimension_numbers<[1], [0], [0], [1], [0, 0, 1, 1], [], []>} : vector<16x64xbf16>, vector<64x64xbf16>, vector<16x64xf32> -> vector<16x64xf32>
    %c0_33 = arith.constant 0 : index
    %c1_34 = arith.constant 1 : index
    %c0_35 = arith.constant 0 : index
    %44 = vector.load %arg11[%c0_33, %c1_34, %c0_35] : memref<1x18x64xbf16, #tpu.memory_space<vmem>>, vector<1x16x64xbf16>
    %45 = vector.shape_cast %44 : vector<1x16x64xbf16> to vector<16x64xbf16>
    %c1_36 = arith.constant 1 : index
    %c0_37 = arith.constant 0 : index
    %c0_38 = arith.constant 0 : index
    %46 = vector.load %arg5[%c1_36, %c0_37, %c0_38] : memref<3x64x64xbf16, #tpu.memory_space<vmem>>, vector<1x64x64xbf16>
    %47 = vector.shape_cast %46 : vector<1x64x64xbf16> to vector<64x64xbf16>
    %cst_39 = arith.constant dense<0.000000e+00> : vector<16x64xf32>
    %48 = tpu.matmul %45, %47, %cst_39 {dimension_numbers = #tpu.dot_dimension_numbers<[1], [0], [0], [1], [0, 0, 1, 1], [], []>} : vector<16x64xbf16>, vector<64x64xbf16>, vector<16x64xf32> -> vector<16x64xf32>
    %49 = arith.addf %43, %48 : vector<16x64xf32>
    %c0_40 = arith.constant 0 : index
    %c2_41 = arith.constant 2 : index
    %c0_42 = arith.constant 0 : index
    %50 = vector.load %arg11[%c0_40, %c2_41, %c0_42] : memref<1x18x64xbf16, #tpu.memory_space<vmem>>, vector<1x16x64xbf16>
    %51 = vector.shape_cast %50 : vector<1x16x64xbf16> to vector<16x64xbf16>
    %c2_43 = arith.constant 2 : index
    %c0_44 = arith.constant 0 : index
    %c0_45 = arith.constant 0 : index
    %52 = vector.load %arg5[%c2_43, %c0_44, %c0_45] : memref<3x64x64xbf16, #tpu.memory_space<vmem>>, vector<1x64x64xbf16>
    %53 = vector.shape_cast %52 : vector<1x64x64xbf16> to vector<64x64xbf16>
    %cst_46 = arith.constant dense<0.000000e+00> : vector<16x64xf32>
    %54 = tpu.matmul %51, %53, %cst_46 {dimension_numbers = #tpu.dot_dimension_numbers<[1], [0], [0], [1], [0, 0, 1, 1], [], []>} : vector<16x64xbf16>, vector<64x64xbf16>, vector<16x64xf32> -> vector<16x64xf32>
    %55 = arith.addf %49, %54 : vector<16x64xf32>
    %c0_47 = arith.constant 0 : index
    %c0_48 = arith.constant 0 : index
    %c0_49 = arith.constant 0 : index
    %56 = vector.load %arg12[%c0_47, %c0_48, %c0_49] : memref<1x18x64xbf16, #tpu.memory_space<vmem>>, vector<1x16x64xbf16>
    %57 = vector.shape_cast %56 : vector<1x16x64xbf16> to vector<16x64xbf16>
    %c0_50 = arith.constant 0 : index
    %c0_51 = arith.constant 0 : index
    %c0_52 = arith.constant 0 : index
    %58 = vector.load %arg6[%c0_50, %c0_51, %c0_52] : memref<3x64x64xbf16, #tpu.memory_space<vmem>>, vector<1x64x64xbf16>
    %59 = vector.shape_cast %58 : vector<1x64x64xbf16> to vector<64x64xbf16>
    %cst_53 = arith.constant dense<0.000000e+00> : vector<16x64xf32>
    %60 = tpu.matmul %57, %59, %cst_53 {dimension_numbers = #tpu.dot_dimension_numbers<[1], [0], [0], [1], [0, 0, 1, 1], [], []>} : vector<16x64xbf16>, vector<64x64xbf16>, vector<16x64xf32> -> vector<16x64xf32>
    %c0_54 = arith.constant 0 : index
    %c1_55 = arith.constant 1 : index
    %c0_56 = arith.constant 0 : index
    %61 = vector.load %arg12[%c0_54, %c1_55, %c0_56] : memref<1x18x64xbf16, #tpu.memory_space<vmem>>, vector<1x16x64xbf16>
    %62 = vector.shape_cast %61 : vector<1x16x64xbf16> to vector<16x64xbf16>
    %c1_57 = arith.constant 1 : index
    %c0_58 = arith.constant 0 : index
    %c0_59 = arith.constant 0 : index
    %63 = vector.load %arg6[%c1_57, %c0_58, %c0_59] : memref<3x64x64xbf16, #tpu.memory_space<vmem>>, vector<1x64x64xbf16>
    %64 = vector.shape_cast %63 : vector<1x64x64xbf16> to vector<64x64xbf16>
    %cst_60 = arith.constant dense<0.000000e+00> : vector<16x64xf32>
    %65 = tpu.matmul %62, %64, %cst_60 {dimension_numbers = #tpu.dot_dimension_numbers<[1], [0], [0], [1], [0, 0, 1, 1], [], []>} : vector<16x64xbf16>, vector<64x64xbf16>, vector<16x64xf32> -> vector<16x64xf32>
    %66 = arith.addf %60, %65 : vector<16x64xf32>
    %c0_61 = arith.constant 0 : index
    %c2_62 = arith.constant 2 : index
    %c0_63 = arith.constant 0 : index
    %67 = vector.load %arg12[%c0_61, %c2_62, %c0_63] : memref<1x18x64xbf16, #tpu.memory_space<vmem>>, vector<1x16x64xbf16>
    %68 = vector.shape_cast %67 : vector<1x16x64xbf16> to vector<16x64xbf16>
    %c2_64 = arith.constant 2 : index
    %c0_65 = arith.constant 0 : index
    %c0_66 = arith.constant 0 : index
    %69 = vector.load %arg6[%c2_64, %c0_65, %c0_66] : memref<3x64x64xbf16, #tpu.memory_space<vmem>>, vector<1x64x64xbf16>
    %70 = vector.shape_cast %69 : vector<1x64x64xbf16> to vector<64x64xbf16>
    %cst_67 = arith.constant dense<0.000000e+00> : vector<16x64xf32>
    %71 = tpu.matmul %68, %70, %cst_67 {dimension_numbers = #tpu.dot_dimension_numbers<[1], [0], [0], [1], [0, 0, 1, 1], [], []>} : vector<16x64xbf16>, vector<64x64xbf16>, vector<16x64xf32> -> vector<16x64xf32>
    %72 = arith.addf %66, %71 : vector<16x64xf32>
    %73 = arith.addf %55, %72 : vector<16x64xf32>
    %c0_68 = arith.constant 0 : index
    %c0_69 = arith.constant 0 : index
    %74 = vector.load %arg7[%c0_68, %c0_69] : memref<1x64xf32, #tpu.memory_space<vmem>>, vector<1x64xf32>
    %75 = vector.broadcast %74 : vector<1x64xf32> to vector<16x64xf32>
    %76 = arith.addf %73, %75 : vector<16x64xf32>
    %cst_70 = arith.constant 0.000000e+00 : f32
    %77 = vector.broadcast %cst_70 : f32 to vector<16x64xf32>
    %78 = arith.maximumf %76, %77 : vector<16x64xf32>
    %cst_71 = arith.constant 0.000000e+00 : bf16
    %79 = vector.broadcast %cst_71 : bf16 to vector<1x1x64xbf16>
    %c0_72 = arith.constant 0 : index
    %c0_73 = arith.constant 0 : index
    %c0_74 = arith.constant 0 : index
    %80 = vector.load %arg13[%c0_72, %c0_73, %c0_74] : memref<1x18x64xbf16, #tpu.memory_space<vmem>>, vector<1x1x64xbf16>
    tpu.vector_store %arg13[%c0_72, %c0_73, %c0_74], %79 {strides = array<i32>} : memref<1x18x64xbf16, #tpu.memory_space<vmem>>, vector<1x1x64xbf16>,
    %c0_75 = arith.constant 0 : index
    %c17_76 = arith.constant 17 : index
    %c0_77 = arith.constant 0 : index
    %81 = vector.load %arg13[%c0_75, %c17_76, %c0_77] : memref<1x18x64xbf16, #tpu.memory_space<vmem>>, vector<1x1x64xbf16>
    tpu.vector_store %arg13[%c0_75, %c17_76, %c0_77], %79 {strides = array<i32>} : memref<1x18x64xbf16, #tpu.memory_space<vmem>>, vector<1x1x64xbf16>,
    %82 = vector.shape_cast %78 : vector<16x64xf32> to vector<1x16x64xf32>
    %83 = arith.truncf %82 : vector<1x16x64xf32> to vector<1x16x64xbf16>
    %c0_78 = arith.constant 0 : index
    %c1_79 = arith.constant 1 : index
    %c0_80 = arith.constant 0 : index
    %84 = vector.load %arg13[%c0_78, %c1_79, %c0_80] : memref<1x18x64xbf16, #tpu.memory_space<vmem>>, vector<1x16x64xbf16>
    tpu.vector_store %arg13[%c0_78, %c1_79, %c0_80], %83 {strides = array<i32>} : memref<1x18x64xbf16, #tpu.memory_space<vmem>>, vector<1x16x64xbf16>,
    %c0_81 = arith.constant 0 : index
    %c0_82 = arith.constant 0 : index
    %c0_83 = arith.constant 0 : index
    %85 = vector.load %arg13[%c0_81, %c0_82, %c0_83] : memref<1x18x64xbf16, #tpu.memory_space<vmem>>, vector<1x16x64xbf16>
    %86 = vector.shape_cast %85 : vector<1x16x64xbf16> to vector<16x64xbf16>
    %c0_84 = arith.constant 0 : index
    %c0_85 = arith.constant 0 : index
    %c0_86 = arith.constant 0 : index
    %87 = vector.load %arg8[%c0_84, %c0_85, %c0_86] : memref<3x64x64xbf16, #tpu.memory_space<vmem>>, vector<1x64x64xbf16>
    %88 = vector.shape_cast %87 : vector<1x64x64xbf16> to vector<64x64xbf16>
    %cst_87 = arith.constant dense<0.000000e+00> : vector<16x64xf32>
    %89 = tpu.matmul %86, %88, %cst_87 {dimension_numbers = #tpu.dot_dimension_numbers<[1], [0], [0], [1], [0, 0, 1, 1], [], []>} : vector<16x64xbf16>, vector<64x64xbf16>, vector<16x64xf32> -> vector<16x64xf32>
    %c0_88 = arith.constant 0 : index
    %c1_89 = arith.constant 1 : index
    %c0_90 = arith.constant 0 : index
    %90 = vector.load %arg13[%c0_88, %c1_89, %c0_90] : memref<1x18x64xbf16, #tpu.memory_space<vmem>>, vector<1x16x64xbf16>
    %91 = vector.shape_cast %90 : vector<1x16x64xbf16> to vector<16x64xbf16>
    %c1_91 = arith.constant 1 : index
    %c0_92 = arith.constant 0 : index
    %c0_93 = arith.constant 0 : index
    %92 = vector.load %arg8[%c1_91, %c0_92, %c0_93] : memref<3x64x64xbf16, #tpu.memory_space<vmem>>, vector<1x64x64xbf16>
    %93 = vector.shape_cast %92 : vector<1x64x64xbf16> to vector<64x64xbf16>
    %cst_94 = arith.constant dense<0.000000e+00> : vector<16x64xf32>
    %94 = tpu.matmul %91, %93, %cst_94 {dimension_numbers = #tpu.dot_dimension_numbers<[1], [0], [0], [1], [0, 0, 1, 1], [], []>} : vector<16x64xbf16>, vector<64x64xbf16>, vector<16x64xf32> -> vector<16x64xf32>
    %95 = arith.addf %89, %94 : vector<16x64xf32>
    %c0_95 = arith.constant 0 : index
    %c2_96 = arith.constant 2 : index
    %c0_97 = arith.constant 0 : index
    %96 = vector.load %arg13[%c0_95, %c2_96, %c0_97] : memref<1x18x64xbf16, #tpu.memory_space<vmem>>, vector<1x16x64xbf16>
    %97 = vector.shape_cast %96 : vector<1x16x64xbf16> to vector<16x64xbf16>
    %c2_98 = arith.constant 2 : index
    %c0_99 = arith.constant 0 : index
    %c0_100 = arith.constant 0 : index
    %98 = vector.load %arg8[%c2_98, %c0_99, %c0_100] : memref<3x64x64xbf16, #tpu.memory_space<vmem>>, vector<1x64x64xbf16>
    %99 = vector.shape_cast %98 : vector<1x64x64xbf16> to vector<64x64xbf16>
    %cst_101 = arith.constant dense<0.000000e+00> : vector<16x64xf32>
    %100 = tpu.matmul %97, %99, %cst_101 {dimension_numbers = #tpu.dot_dimension_numbers<[1], [0], [0], [1], [0, 0, 1, 1], [], []>} : vector<16x64xbf16>, vector<64x64xbf16>, vector<16x64xf32> -> vector<16x64xf32>
    %101 = arith.addf %95, %100 : vector<16x64xf32>
    %c0_102 = arith.constant 0 : index
    %c0_103 = arith.constant 0 : index
    %102 = vector.load %arg9[%c0_102, %c0_103] : memref<1x64xf32, #tpu.memory_space<vmem>>, vector<1x64xf32>
    %103 = vector.broadcast %102 : vector<1x64xf32> to vector<16x64xf32>
    %104 = arith.addf %101, %103 : vector<16x64xf32>
    %cst_104 = arith.constant 0.000000e+00 : f32
    %105 = vector.broadcast %cst_104 : f32 to vector<16x64xf32>
    %106 = arith.maximumf %104, %105 : vector<16x64xf32>
    %107 = vector.shape_cast %106 : vector<16x64xf32> to vector<1x16x64xf32>
    %c0_105 = arith.constant 0 : index
    %c0_106 = arith.constant 0 : index
    %c0_107 = arith.constant 0 : index
    %108 = vector.load %arg10[%c0_105, %c0_106, %c0_107] : memref<1x16x64xf32, #tpu.memory_space<vmem>>, vector<1x16x64xf32>
    tpu.vector_store %arg10[%c0_105, %c0_106, %c0_107], %107 {strides = array<i32>} : memref<1x16x64xf32, #tpu.memory_space<vmem>>, vector<1x16x64xf32>,
    return
  }
  func.func @transform_0(%arg0: i32) -> (i32, i32, i32) {
    %c0_i32 = arith.constant 0 : i32
    %c0_i32_0 = arith.constant 0 : i32
    %c0_i32_1 = arith.constant 0 : i32
    return %arg0, %c0_i32, %c0_i32_0 : i32, i32, i32
  }
  func.func @transform_1(%arg0: i32) -> (i32, i32, i32) {
    %c0_i32 = arith.constant 0 : i32
    %c0_i32_0 = arith.constant 0 : i32
    %c0_i32_1 = arith.constant 0 : i32
    return %arg0, %c0_i32, %c0_i32_0 : i32, i32, i32
  }
  func.func @transform_2(%arg0: i32) -> (i32, i32) {
    %c0_i32 = arith.constant 0 : i32
    %c0_i32_0 = arith.constant 0 : i32
    %c0_i32_1 = arith.constant 0 : i32
    return %c0_i32, %c0_i32_0 : i32, i32
  }
  func.func @transform_3(%arg0: i32) -> (i32, i32) {
    %c0_i32 = arith.constant 0 : i32
    %c0_i32_0 = arith.constant 0 : i32
    %c0_i32_1 = arith.constant 0 : i32
    return %c0_i32, %c0_i32_0 : i32, i32
  }
  func.func @transform_4(%arg0: i32) -> (i32, i32, i32) {
    %c0_i32 = arith.constant 0 : i32
    %c0_i32_0 = arith.constant 0 : i32
    %c0_i32_1 = arith.constant 0 : i32
    %c0_i32_2 = arith.constant 0 : i32
    return %c0_i32, %c0_i32_0, %c0_i32_1 : i32, i32, i32
  }
  func.func @transform_5(%arg0: i32) -> (i32, i32, i32) {
    %c0_i32 = arith.constant 0 : i32
    %c0_i32_0 = arith.constant 0 : i32
    %c0_i32_1 = arith.constant 0 : i32
    %c0_i32_2 = arith.constant 0 : i32
    return %c0_i32, %c0_i32_0, %c0_i32_1 : i32, i32, i32
  }
  func.func @transform_6(%arg0: i32) -> (i32, i32) {
    %c0_i32 = arith.constant 0 : i32
    %c0_i32_0 = arith.constant 0 : i32
    %c0_i32_1 = arith.constant 0 : i32
    return %c0_i32, %c0_i32_0 : i32, i32
  }
  func.func @transform_7(%arg0: i32) -> (i32, i32, i32) {
    %c0_i32 = arith.constant 0 : i32
    %c0_i32_0 = arith.constant 0 : i32
    %c0_i32_1 = arith.constant 0 : i32
    %c0_i32_2 = arith.constant 0 : i32
    return %c0_i32, %c0_i32_0, %c0_i32_1 : i32, i32, i32
  }
  func.func @transform_8(%arg0: i32) -> (i32, i32) {
    %c0_i32 = arith.constant 0 : i32
    %c0_i32_0 = arith.constant 0 : i32
    %c0_i32_1 = arith.constant 0 : i32
    return %c0_i32, %c0_i32_0 : i32, i32
  }
  func.func @transform_9(%arg0: i32) -> (i32, i32, i32) {
    %c0_i32 = arith.constant 0 : i32
    %c0_i32_0 = arith.constant 0 : i32
    %c0_i32_1 = arith.constant 0 : i32
    return %arg0, %c0_i32, %c0_i32_0 : i32, i32, i32
  }
}

</mosaic_0001>

<llo_original>
// kernel: unet_up_c_forward.1
$region0: #{unet_up_c_forward.1}
  #allocation0 [shape = 'u32[]', space=smem, size = 0x4, offset = 0x4, fixed_abs, tag = 'smem constant byte address 0x4 - core index']
  #allocation1 [shape = 'u32[72,128]{1,0:T(1,128)}', space=vmem, size = 0x9000, scoped, tag = 'internal scratch']
  #allocation2 [shape = 'bf16[1,18,64]{2,1,0:T(8,128)(2,1)}', space=vmem, size = 0x1800, scoped, tag = 'scratch operand']
  #allocation3 [shape = 'bf16[1,18,64]{2,1,0:T(8,128)(2,1)}', space=vmem, size = 0x1800, scoped, tag = 'scratch operand']
  #allocation4 [shape = 'bf16[1,18,64]{2,1,0:T(8,128)(2,1)}', space=vmem, size = 0x1800, scoped, tag = 'scratch operand']
  %s0 = inlined_call_operand.vmem [shape: bf16[2,14,56], index: 0, kind: input, shape index: {}]
  %s1 = inlined_call_operand.vmem [shape: bf16[2,16,128], index: 1, kind: input, shape index: {}]
  %s2 = inlined_call_operand.vmem [shape: bf16[128,128], index: 2, kind: input, shape index: {}]
  %s3 = inlined_call_operand.vmem [shape: f32[1,64], index: 3, kind: input, shape index: {}]
  %s4 = inlined_call_operand.vmem [shape: bf16[3,64,64], index: 4, kind: input, shape index: {}]
  %s5 = inlined_call_operand.vmem [shape: bf16[3,64,64], index: 5, kind: input, shape index: {}]
  %s6 = inlined_call_operand.vmem [shape: f32[1,64], index: 6, kind: input, shape index: {}]
  %s7 = inlined_call_operand.vmem [shape: bf16[3,64,64], index: 7, kind: input, shape index: {}]
  %s8 = inlined_call_operand.vmem [shape: f32[1,64], index: 8, kind: input, shape index: {}]
  %s9 = inlined_call_operand.vmem [shape: f32[2,16,64], index: 9, kind: output, shape index: {}]
  %s10 = sld [smem:[#allocation0]]
  $region69: #{unet_up_c_forward.1} parent=0
    _
  %s12 = ssub.s32 1, %s10
  %s13 = scalar_select 0, %s12, %s10
  loop: start=0, step=1, limit=4
  $region2: #{unet_up_c_forward.1} parent=0 // loop_pre_header
    _
  $region3: #{unet_up_c_forward.1} parent=0 // loop_header
    %s15 = sphi 0, %s19
    %p16 = scmp.ge.s32.totalorder %s15, 4
    %s25 = sphi 0, %s27
    %s28 = sphi 0, %s25
    %s29 = sphi 0, %s28
    %s45 = sphi 0, %s29
    %s51 = sphi 0, %s53
    %s54 = sphi 0, %s51
    %s55 = sphi 0, %s54
    %s71 = sphi 0, %s55
    %s75 = sphi 0, %s75
    %s77 = sphi 0, %s75
    %s78 = sphi 0, %s77
    %s92 = sphi 0, %s78
    %s96 = sphi 0, %s96
    %s98 = sphi 0, %s96
    %s99 = sphi 0, %s98
    %s113 = sphi 0, %s99
    %s117 = sphi 0, %s117
    %s119 = sphi 0, %s117
    %s120 = sphi 0, %s119
    %s134 = sphi 0, %s120
    %s138 = sphi 0, %s138
    %s140 = sphi 0, %s138
    %s141 = sphi 0, %s140
    %s155 = sphi 0, %s141
    %s159 = sphi 0, %s159
    %s161 = sphi 0, %s159
    %s162 = sphi 0, %s161
    %s176 = sphi 0, %s162
    %s180 = sphi 0, %s180
    %s182 = sphi 0, %s180
    %s183 = sphi 0, %s182
    %s197 = sphi 0, %s183
    %s201 = sphi 0, %s201
    %s203 = sphi 0, %s201
    %s204 = sphi 0, %s203
    %s218 = sphi 0, %s204
    %s224 = sphi 0, %s226
    %s227 = sphi 0, %s224
    %s228 = sphi 0, %s227
    %s244 = sphi 0, %s228
  $region4: #{unet_up_c_forward.1} parent=0 // loop_header_branch
    %18 = sbr.rel (%p16) target = $region8
  $region5: #{unet_up_c_forward.1} parent=0 // loop_body
    %s20 = ssub.s32 %s15, 1
    %s21 = ssub.s32 %s15, 2
    %s22 = sadd.s32 %s15, 1
    %s23 = ssub.s32 %s15, %s22
    %p24 = scmp.eq.s32.totalorder %s23, 0
    %s26 = sadd.s32 %s25, 1
    %s27 = scalar_select %p24, %s25, %s26
    %p30 = pneg %p24
    %p31 = scmp.eq.s32.totalorder %s15, 1
    %p32 = por %p30, %p31
    %p33 = scmp.ne.s32.totalorder %s25, %s28
    %p34 = scmp.eq.s32.totalorder %s15, 0
    %p35 = por %p33, %p34
    %p36 = scmp.ne.s32.totalorder %s25, %s28
    %p37 = scmp.eq.s32.totalorder %s20, 1
    %p38 = por %p36, %p37
    %p39 = scmp.ne.s32.totalorder %s28, %s29
    %p40 = scmp.eq.s32.totalorder %s20, 0
    %p41 = por %p39, %p40
    %p42 = scmp.ne.s32.totalorder %s28, %s29
    %p43 = scmp.eq.s32.totalorder %s21, 1
    %p44 = por %p42, %p43
    %p46 = scmp.ne.s32.totalorder %s29, %s45
    %p47 = scmp.eq.s32.totalorder %s21, 0
    %p48 = por %p46, %p47
    %s49 = ssub.s32 %s15, %s22
    %p50 = scmp.eq.s32.totalorder %s49, 0
    %s52 = sadd.s32 %s51, 1
    %s53 = scalar_select %p50, %s51, %s52
    %p56 = pneg %p50
    %p57 = scmp.eq.s32.totalorder %s15, 1
    %p58 = por %p56, %p57
    %p59 = scmp.ne.s32.totalorder %s51, %s54
    %p60 = scmp.eq.s32.totalorder %s15, 0
    %p61 = por %p59, %p60
    %p62 = scmp.ne.s32.totalorder %s51, %s54
    %p63 = scmp.eq.s32.totalorder %s20, 1
    %p64 = por %p62, %p63
    %p65 = scmp.ne.s32.totalorder %s54, %s55
    %p66 = scmp.eq.s32.totalorder %s20, 0
    %p67 = por %p65, %p66
    %p68 = scmp.ne.s32.totalorder %s54, %s55
    %p69 = scmp.eq.s32.totalorder %s21, 1
    %p70 = por %p68, %p69
    %p72 = scmp.ne.s32.totalorder %s55, %s71
    %p73 = scmp.eq.s32.totalorder %s21, 0
    %p74 = por %p72, %p73
    %s76 = sadd.s32 %s75, 1
    %p79 = scmp.eq.s32.totalorder %s15, 1
    %p80 = scmp.ne.s32.totalorder %s75, %s77
    %p81 = scmp.eq.s32.totalorder %s15, 0
    %p82 = por %p80, %p81
    %p83 = scmp.ne.s32.totalorder %s75, %s77
    %p84 = scmp.eq.s32.totalorder %s20, 1
    %p85 = por %p83, %p84
    %p86 = scmp.ne.s32.totalorder %s77, %s78
    %p87 = scmp.eq.s32.totalorder %s20, 0
    %p88 = por %p86, %p87
    %p89 = scmp.ne.s32.totalorder %s77, %s78
    %p90 = scmp.eq.s32.totalorder %s21, 1
    %p91 = por %p89, %p90
    %p93 = scmp.ne.s32.totalorder %s78, %s92
    %p94 = scmp.eq.s32.totalorder %s21, 0
    %p95 = por %p93, %p94
    %s97 = sadd.s32 %s96, 1
    %p100 = scmp.eq.s32.totalorder %s15, 1
    %p101 = scmp.ne.s32.totalorder %s96, %s98
    %p102 = scmp.eq.s32.totalorder %s15, 0
    %p103 = por %p101, %p102
    %p104 = scmp.ne.s32.totalorder %s96, %s98
    %p105 = scmp.eq.s32.totalorder %s20, 1
    %p106 = por %p104, %p105
    %p107 = scmp.ne.s32.totalorder %s98, %s99
    %p108 = scmp.eq.s32.totalorder %s20, 0
    %p109 = por %p107, %p108
    %p110 = scmp.ne.s32.totalorder %s98, %s99
    %p111 = scmp.eq.s32.totalorder %s21, 1
    %p112 = por %p110, %p111
    %p114 = scmp.ne.s32.totalorder %s99, %s113
    %p115 = scmp.eq.s32.totalorder %s21, 0
    %p116 = por %p114, %p115
    %s118 = sadd.s32 %s117, 1
    %p121 = scmp.eq.s32.totalorder %s15, 1
    %p122 = scmp.ne.s32.totalorder %s117, %s119
    %p123 = scmp.eq.s32.totalorder %s15, 0
    %p124 = por %p122, %p123
    %p125 = scmp.ne.s32.totalorder %s117, %s119
    %p126 = scmp.eq.s32.totalorder %s20, 1
    %p127 = por %p125, %p126
    %p128 = scmp.ne.s32.totalorder %s119, %s120
    %p129 = scmp.eq.s32.totalorder %s20, 0
    %p130 = por %p128, %p129
    %p131 = scmp.ne.s32.totalorder %s119, %s120
    %p132 = scmp.eq.s32.totalorder %s21, 1
    %p133 = por %p131, %p132
    %p135 = scmp.ne.s32.totalorder %s120, %s134
    %p136 = scmp.eq.s32.totalorder %s21, 0
    %p137 = por %p135, %p136
    %s139 = sadd.s32 %s138, 1
    %p142 = scmp.eq.s32.totalorder %s15, 1
    %p143 = scmp.ne.s32.totalorder %s138, %s140
    %p144 = scmp.eq.s32.totalorder %s15, 0
    %p145 = por %p143, %p144
    %p146 = scmp.ne.s32.totalorder %s138, %s140
    %p147 = scmp.eq.s32.totalorder %s20, 1
    %p148 = por %p146, %p147
    %p149 = scmp.ne.s32.totalorder %s140, %s141
    %p150 = scmp.eq.s32.totalorder %s20, 0
    %p151 = por %p149, %p150
    %p152 = scmp.ne.s32.totalorder %s140, %s141
    %p153 = scmp.eq.s32.totalorder %s21, 1
    %p154 = por %p152, %p153
    %p156 = scmp.ne.s32.totalorder %s141, %s155
    %p157 = scmp.eq.s32.totalorder %s21, 0
    %p158 = por %p156, %p157
    %s160 = sadd.s32 %s159, 1
    %p163 = scmp.eq.s32.totalorder %s15, 1
    %p164 = scmp.ne.s32.totalorder %s159, %s161
    %p165 = scmp.eq.s32.totalorder %s15, 0
    %p166 = por %p164, %p165
    %p167 = scmp.ne.s32.totalorder %s159, %s161
    %p168 = scmp.eq.s32.totalorder %s20, 1
    %p169 = por %p167, %p168
    %p170 = scmp.ne.s32.totalorder %s161, %s162
    %p171 = scmp.eq.s32.totalorder %s20, 0
    %p172 = por %p170, %p171
    %p173 = scmp.ne.s32.totalorder %s161, %s162
    %p174 = scmp.eq.s32.totalorder %s21, 1
    %p175 = por %p173, %p174
    %p177 = scmp.ne.s32.totalorder %s162, %s176
    %p178 = scmp.eq.s32.totalorder %s21, 0
    %p179 = por %p177, %p178
    %s181 = sadd.s32 %s180, 1
    %p184 = scmp.eq.s32.totalorder %s15, 1
    %p185 = scmp.ne.s32.totalorder %s180, %s182
    %p186 = scmp.eq.s32.totalorder %s15, 0
    %p187 = por %p185, %p186
    %p188 = scmp.ne.s32.totalorder %s180, %s182
    %p189 = scmp.eq.s32.totalorder %s20, 1
    %p190 = por %p188, %p189
    %p191 = scmp.ne.s32.totalorder %s182, %s183
    %p192 = scmp.eq.s32.totalorder %s20, 0
    %p193 = por %p191, %p192
    %p194 = scmp.ne.s32.totalorder %s182, %s183
    %p195 = scmp.eq.s32.totalorder %s21, 1
    %p196 = por %p194, %p195
    %p198 = scmp.ne.s32.totalorder %s183, %s197
    %p199 = scmp.eq.s32.totalorder %s21, 0
    %p200 = por %p198, %p199
    %s202 = sadd.s32 %s201, 1
    %p205 = scmp.eq.s32.totalorder %s15, 1
    %p206 = scmp.ne.s32.totalorder %s201, %s203
    %p207 = scmp.eq.s32.totalorder %s15, 0
    %p208 = por %p206, %p207
    %p209 = scmp.ne.s32.totalorder %s201, %s203
    %p210 = scmp.eq.s32.totalorder %s20, 1
    %p211 = por %p209, %p210
    %p212 = scmp.ne.s32.totalorder %s203, %s204
    %p213 = scmp.eq.s32.totalorder %s20, 0
    %p214 = por %p212, %p213
    %p215 = scmp.ne.s32.totalorder %s203, %s204
    %p216 = scmp.eq.s32.totalorder %s21, 1
    %p217 = por %p215, %p216
    %p219 = scmp.ne.s32.totalorder %s204, %s218
    %p220 = scmp.eq.s32.totalorder %s21, 0
    %p221 = por %p219, %p220
    %s222 = ssub.s32 %s15, %s22
    %p223 = scmp.eq.s32.totalorder %s222, 0
    %s225 = sadd.s32 %s224, 1
    %s226 = scalar_select %p223, %s224, %s225
    %p229 = pneg %p223
    %p230 = scmp.eq.s32.totalorder %s15, 1
    %p231 = por %p229, %p230
    %p232 = scmp.ne.s32.totalorder %s224, %s227
    %p233 = scmp.eq.s32.totalorder %s15, 0
    %p234 = por %p232, %p233
    %p235 = scmp.ne.s32.totalorder %s224, %s227
    %p236 = scmp.eq.s32.totalorder %s20, 1
    %p237 = por %p235, %p236
    %p238 = scmp.ne.s32.totalorder %s227, %s228
    %p239 = scmp.eq.s32.totalorder %s20, 0
    %p240 = por %p238, %p239
    %p241 = scmp.ne.s32.totalorder %s227, %s228
    %p242 = scmp.eq.s32.totalorder %s21, 1
    %p243 = por %p241, %p242
    %p245 = scmp.ne.s32.totalorder %s228, %s244
    %p246 = scmp.eq.s32.totalorder %s21, 0
    %p247 = por %p245, %p246
    %p248 = scmp.le.s32.totalorder 1, %s15
    %p249 = scmp.lt.s32.totalorder %s15, 3
    %p250 = pnand %p248, %p249
    %p251 = pneg %p250
    // Predicated region
    $region9: #{unet_up_c_forward.1} parent=5 // pred_check
      _
    $region10: #{unet_up_c_forward.1} parent=5 // pred_check_branch
      %253 = sbr.rel (%p250) target = $region12
    $region11: #{unet_up_c_forward.1} parent=5 // pred_region
      %s254 = ssub.s32 %s15, 1
      // Predicated region
      $region13: #{unet_up_c_forward.1} parent=11 // pred_check
        %p255 = pneg %p88
      $region14: #{unet_up_c_forward.1} parent=11 // pred_check_branch
        %257 = sbr.rel (%p255) target = $region16
      $region15: #{unet_up_c_forward.1} parent=11 // pred_region
        _
      $region16: #{unet_up_c_forward.1} parent=11 // pred_fallthru
        _
      // Predicated region
      $region17: #{unet_up_c_forward.1} parent=11 // pred_check
        %p258 = pneg %p109
      $region18: #{unet_up_c_forward.1} parent=11 // pred_check_branch
        %260 = sbr.rel (%p258) target = $region20
      $region19: #{unet_up_c_forward.1} parent=11 // pred_region
        _
      $region20: #{unet_up_c_forward.1} parent=11 // pred_fallthru
        _
      // Predicated region
      $region21: #{unet_up_c_forward.1} parent=11 // pred_check
        %p261 = pneg %p130
      $region22: #{unet_up_c_forward.1} parent=11 // pred_check_branch
        %263 = sbr.rel (%p261) target = $region24
      $region23: #{unet_up_c_forward.1} parent=11 // pred_region
        _
      $region24: #{unet_up_c_forward.1} parent=11 // pred_fallthru
        _
      // Predicated region
      $region25: #{unet_up_c_forward.1} parent=11 // pred_check
        %p264 = pneg %p151
      $region26: #{unet_up_c_forward.1} parent=11 // pred_check_branch
        %266 = sbr.rel (%p264) target = $region28
      $region27: #{unet_up_c_forward.1} parent=11 // pred_region
        _
      $region28: #{unet_up_c_forward.1} parent=11 // pred_fallthru
        _
      // Predicated region
      $region29: #{unet_up_c_forward.1} parent=11 // pred_check
        %p267 = pneg %p172
      $region30: #{unet_up_c_forward.1} parent=11 // pred_check_branch
        %269 = sbr.rel (%p267) target = $region32
      $region31: #{unet_up_c_forward.1} parent=11 // pred_region
        _
      $region32: #{unet_up_c_forward.1} parent=11 // pred_fallthru
        _
      // Predicated region
      $region33: #{unet_up_c_forward.1} parent=11 // pred_check
        %p270 = pneg %p193
      $region34: #{unet_up_c_forward.1} parent=11 // pred_check_branch
        %272 = sbr.rel (%p270) target = $region36
      $region35: #{unet_up_c_forward.1} parent=11 // pred_region
        _
      $region36: #{unet_up_c_forward.1} parent=11 // pred_fallthru
        _
      // Predicated region
      $region37: #{unet_up_c_forward.1} parent=11 // pred_check
        %p273 = pneg %p214
      $region38: #{unet_up_c_forward.1} parent=11 // pred_check_branch
        %275 = sbr.rel (%p273) target = $region40
      $region39: #{unet_up_c_forward.1} parent=11 // pred_region
        _
      $region40: #{unet_up_c_forward.1} parent=11 // pred_fallthru
        _
    $region12: #{unet_up_c_forward.1} parent=5 // pred_fallthru
      _
    %p276 = scmp.lt.s32.totalorder %s15, 2
    // Predicated region
    $region41: #{unet_up_c_forward.1} parent=5 // pred_check
      %p277 = pneg %p276
    $region42: #{unet_up_c_forward.1} parent=5 // pred_check_branch
      %279 = sbr.rel (%p277) target = $region44
    $region43: #{unet_up_c_forward.1} parent=5 // pred_region
      // Predicated region
      $region45: #{unet_up_c_forward.1} parent=43 // pred_check
        %p280 = pneg %p35
      $region46: #{unet_up_c_forward.1} parent=43 // pred_check_branch
        %282 = sbr.rel (%p280) target = $region48
      $region47: #{unet_up_c_forward.1} parent=43 // pred_region
        %p283 = scmp.lt.s32.totalorder %s15, 1
        %s284 = scalar_select %p283, %s15, 1
        %s285 = smul.addr %s284, 2
        %s286 = smul.addr %s285, 4
        %s287 = scalar_lea.vmem %s0, %s286
      $region48: #{unet_up_c_forward.1} parent=43 // pred_fallthru
        _
      // Predicated region
      $region49: #{unet_up_c_forward.1} parent=43 // pred_check
        %p288 = pneg %p61
      $region50: #{unet_up_c_forward.1} parent=43 // pred_check_branch
        %290 = sbr.rel (%p288) target = $region52
      $region51: #{unet_up_c_forward.1} parent=43 // pred_region
        %p291 = scmp.lt.s32.totalorder %s15, 1
        %s292 = scalar_select %p291, %s15, 1
        %s293 = smul.addr %s292, 2
        %s294 = smul.addr %s293, 4
        %s295 = scalar_lea.vmem %s1, %s294
      $region52: #{unet_up_c_forward.1} parent=43 // pred_fallthru
        _
    $region44: #{unet_up_c_forward.1} parent=5 // pred_fallthru
      _
    %p296 = scmp.le.s32.totalorder 1, %s15
    %p297 = scmp.lt.s32.totalorder %s15, 3
    %p298 = pnand %p296, %p297
    %p299 = pneg %p298
    // Predicated region
    $region53: #{unet_up_c_forward.1} parent=5 // pred_check
      _
    $region54: #{unet_up_c_forward.1} parent=5 // pred_check_branch
      %301 = sbr.rel (%p298) target = $region56
    $region55: #{unet_up_c_forward.1} parent=5 // pred_region
      %s302 = ssub.s32 %s15, 1
      %p303 = scmp.lt.s32.totalorder %s20, 1
      %s304 = scalar_select %p303, %s20, 1
      %s305 = smul.addr %s304, 2
      %s306 = smul.addr %s305, 4
      %s307 = scalar_lea.vmem %s0, %s306
      %p308 = pneg %p41
      %p309 = pneg %p38
      %p310 = scmp.lt.s32.totalorder %s20, 1
      %s311 = scalar_select %p310, %s20, 1
      %s312 = smul.addr %s311, 2
      %s313 = smul.addr %s312, 4
      %s314 = scalar_lea.vmem %s1, %s313
      %p315 = pneg %p67
      %p316 = pneg %p64
      %p317 = pneg %p88
      %p318 = pneg %p85
      %p319 = pneg %p109
      %p320 = pneg %p106
      %p321 = pneg %p130
      %p322 = pneg %p127
      %p323 = pneg %p151
      %p324 = pneg %p148
      %p325 = pneg %p172
      %p326 = pneg %p169
      %p327 = pneg %p193
      %p328 = pneg %p190
      %p329 = pneg %p214
      %p330 = pneg %p211
      %p331 = pneg %p240
      %p332 = pneg %p237
      %p333 = scmp.lt.s32.totalorder %s20, 1
      %s334 = scalar_select %p333, %s20, 1
      %s335 = smul.addr %s334, 2
      %s336 = smul.addr %s335, 8
      %s337 = scalar_lea.vmem %s9, %s336
      %p338 = scmp.lt.s32.totalorder %s20, 1
      %s339 = scalar_select %p338, %s20, 1
      %s340 = smul.addr %s339, 2
      %s341 = smul.addr %s340, 4
      %s342 = scalar_lea.vmem %s0, %s341
      %p343 = scmp.lt.s32.totalorder %s20, 1
      %s344 = scalar_select %p343, %s20, 1
      %s345 = smul.addr %s344, 2
      %s346 = smul.addr %s345, 4
      %s347 = scalar_lea.vmem %s1, %s346
      %p348 = scmp.lt.s32.totalorder %s20, 1
      %s349 = scalar_select %p348, %s20, 1
      %s350 = smul.addr %s349, 2
      %s351 = smul.addr %s350, 8
      %s352 = scalar_lea.vmem %s9, %s351
      %v354 = vld [vmem:[%s347] sm:$0xf]
      %v355 = vld [vmem:[%s347 + $0x4] sm:$0xf]
      %v356 = vld [vmem:[%s2] sm:$0xf]
      %v357 = vld [vmem:[%s2 + $0x4] sm:$0xf]
      %v358 = vld [vmem:[%s2 + $0x8] sm:$0xf]
      %v359 = vld [vmem:[%s2 + $0xc] sm:$0xf]
      %v360 = vld [vmem:[%s2 + $0x10] sm:$0xf]
      %v361 = vld [vmem:[%s2 + $0x14] sm:$0xf]
      %v362 = vld [vmem:[%s2 + $0x18] sm:$0xf]
      %v363 = vld [vmem:[%s2 + $0x1c] sm:$0xf]
      %v364 = vld [vmem:[%s2 + $0x20] sm:$0xf]
      %v365 = vld [vmem:[%s2 + $0x24] sm:$0xf]
      %v366 = vld [vmem:[%s2 + $0x28] sm:$0xf]
      %v367 = vld [vmem:[%s2 + $0x2c] sm:$0xf]
      %v368 = vld [vmem:[%s2 + $0x30] sm:$0xf]
      %v369 = vld [vmem:[%s2 + $0x34] sm:$0xf]
      %v370 = vld [vmem:[%s2 + $0x38] sm:$0xf]
      %v371 = vld [vmem:[%s2 + $0x3c] sm:$0xf]
      %v374 = vunpack.c.l.b16 %v354
      %v375 = vunpack.c.l.b16 %v355
      %v376 = vpack.c.b16 %v375, %v374
      %v394 = vunpack.c.l.b16 %v356
      %v395 = vunpack.c.l.b16 %v357
      %v396 = vunpack.c.l.b16 %v358
      %v397 = vunpack.c.l.b16 %v359
      %v398 = vunpack.c.l.b16 %v360
      %v399 = vunpack.c.l.b16 %v361
      %v400 = vunpack.c.l.b16 %v362
      %v401 = vunpack.c.l.b16 %v363
      %v402 = vunpack.c.l.b16 %v364
      %v403 = vunpack.c.l.b16 %v365
      %v404 = vunpack.c.l.b16 %v366
      %v405 = vunpack.c.l.b16 %v367
      %v406 = vunpack.c.l.b16 %v368
      %v407 = vunpack.c.l.b16 %v369
      %v408 = vunpack.c.l.b16 %v370
      %v409 = vunpack.c.l.b16 %v371
      %v410 = vpack.c.b16 %v395, %v394
      %v411 = vpack.c.b16 %v397, %v396
      %v412 = vpack.c.b16 %v399, %v398
      %v413 = vpack.c.b16 %v401, %v400
      %v414 = vpack.c.b16 %v403, %v402
      %v415 = vpack.c.b16 %v405, %v404
      %v416 = vpack.c.b16 %v407, %v406
      %v417 = vpack.c.b16 %v409, %v408
      %426 = vmatpush.bf16.msra.mxu0 %v417
      %427 = vmatpush.bf16.msra.mxu0 %v416
      %428 = vmatpush.bf16.msra.mxu0 %v415
      %429 = vmatpush.bf16.msra.mxu0 %v414
      %430 = vmatpush.bf16.msra.mxu0 %v413
      %431 = vmatpush.bf16.msra.mxu0 %v412
      %432 = vmatpush.bf16.msra.mxu0 %v411
      %433 = vmatpush.bf16.msra.mxu0 %v410
      %434 = vmatmul.bf16.gmra.mxu0 %v376
      %v435 = vpop.f32.mrf.mxu0
      %v436 = vadd.f32 0.0, %v435
      %v437 = vpop.f32.mrf.mxu0
      %v438 = vadd.f32 0.0, %v437
      %439 = vdwg.mxu0
      %v440 = vlaneseq
      %v441 = vshrl.u32 %v440, 7
      %v442 = vadd.s32 %v441, 8
      %vm443 = vcmp.lt.s32.totalorder %v441, 0
      %v444 = vsub.s32 0, %v441
      %v445 = vsel %vm443, %v444, %v441
      %v446 = vshrl.u32 %v445, 1
      %v447 = vand.u32 %v445, 1
      %v448 = vsub.s32 0, %v447
      %v449 = vsel %vm443, %v448, %v447
      %vm450 = vcmp.lt.s32.totalorder %v442, 0
      %v451 = vsub.s32 0, %v442
      %v452 = vsel %vm450, %v451, %v442
      %v453 = vshrl.u32 %v452, 1
      %v454 = vand.u32 %v452, 1
      %v455 = vsub.s32 0, %v454
      %v456 = vsel %vm450, %v455, %v454
      %vm457 = vcmp.ne.s32.totalorder %v449, 0
      %vm458 = vcmp.ne.s32.totalorder %v456, 0
      %vm459 = vcmp.lt.s32.totalorder %v449, 0
      %vm460 = vcmp.lt.s32.totalorder %v456, 0
      %vm461 = vmand %vm459, %vm457
      %vm462 = vmand %vm460, %vm458
      %v463 = vadd.s32 %v449, 2
      %v464 = vadd.s32 %v456, 2
      %v465 = vsel %vm461, %v463, %v449
      %v466 = vsel %vm462, %v464, %v456
      %vm467 = vcmp.eq.s32.totalorder %v465, 1
      %vm468 = vcmp.eq.s32.totalorder %v466, 1
      %471 = vrot.lane.b32.xlu0 %v436, 64
      %v472 = vpop.permute.xlu0 %471
      %473 = vrot.lane.b32.xlu0 %v438, 64
      %v474 = vpop.permute.xlu0 %473
      %v477 = vsel %vm467, %v436, %v472
      %v478 = vsel %vm468, %v438, %v474
      %v479 = vld [vmem:[%s3] sm:$0x1]
      %v481 = vperm.slane %v479, 0
      %482 = vrot.lane.b32.xlu0 %v481, 64
      %v483 = vpop.permute.xlu0 %482
      %v485 = vadd.f32 %v477, %v483
      %v486 = vadd.f32 %v478, %v483
      %vm487 = vcmask 516096
      %vm488 = vsmask.f32 256
      %vm489 = vmand %vm487, %vm488
      %v490 = vld [vmem:[#allocation3] sm:$0x1]
      %v491 = vsel %vm489, 0, %v490
      %492 = vst [vmem:[#allocation3] sm:$0x1] %v491
      %vm493 = vsmask.f32 7938
      %vm494 = vmand %vm487, %vm493
      %v495 = vld [vmem:[#allocation3 + $0x8] sm:$0x1]
      %v496 = vsel %vm494, 0, %v495
      %497 = vst [vmem:[#allocation3 + $0x8] sm:$0x1] %v496
      %v498 = vpack.c.bf16 %v485, %v485
      %v499 = vpack.c.bf16 %v486, %v486
      %vm500 = vsmask.f32 4368
      %vm501 = vmor %vm488, %vm500
      %v503 = vshrl.u32 %v498, 16
      %v505 = vrot.slane %v503, 7
      %v506 = vshll.u32 %v498, 16
      %v508 = vor.u32 %v505, %v506
      %v509 = vrot.slane %v505, 4
      %v511 = vshrl.u32 %v499, 16
      %v513 = vrot.slane %v511, 7
      %v514 = vshll.u32 %v499, 16
      %v516 = vor.u32 %v513, %v514
      %v517 = vsel %vm501, %v509, %v516
      %v518 = vrot.slane %v513, 4
      %519 = vrot.lane.b32.xlu0 %v508, 64
      %v520 = vpop.permute.xlu0 %519
      %521 = vrot.lane.b32.xlu0 %v517, 64
      %v522 = vpop.permute.xlu0 %521
      %523 = vrot.lane.b32.xlu0 %v518, 64
      %v524 = vpop.permute.xlu0 %523
      %vm528 = vcmask 519168
      %vm529 = vmand %vm528, %vm493
      %v530 = vld [vmem:[#allocation3] sm:$0xf]
      %v531 = vsel %vm529, %v520, %v530
      %532 = vst [vmem:[#allocation3] sm:$0xf] %v531
      %vm533 = vcmask 519168
      %534 = vst.msk [vmem:[#allocation3 + $0x4] sm:$0xf] %vm533, %v522
      %v535 = vld [vmem:[#allocation3 + $0x8] sm:$0x1]
      %v536 = vsel %vm489, %v524, %v535
      %537 = vst [vmem:[#allocation3 + $0x8] sm:$0x1] %v536
      %538 = vst.msk [vmem:[#allocation2] sm:$0xf] %vm533, 0
      %539 = vst.msk [vmem:[#allocation2 + $0x4] sm:$0xf] %vm533, 0
      %vm540 = vcmask 516096
      %541 = vst.msk [vmem:[#allocation2 + $0x8] sm:$0x1] %vm540, 0
      %v542 = vld [vmem:[%s342] sm:$0xf]
      %v543 = vld [vmem:[%s342 + $0x4] sm:$0x7]
      %vm546 = vcmask 1040384
      %vm547 = vcmask 1044484
      %vm548 = vmor %vm546, %vm547
      %v549 = vrot.slane %v542, 7
      %v550 = vrot.slane %v549, 4
      %v551 = vrot.slane %v543, 7
      %v552 = vsel %vm548, %v550, %v551
      %553 = vrot.lane.b32.xlu0 %v549, 4
      %v554 = vpop.permute.xlu0 %553
      %555 = vrot.lane.b32.xlu0 %v552, 4
      %v556 = vpop.permute.xlu0 %555
      %vm559 = vcmask 486433
      %560 = vst.msk [vmem:[#allocation2] sm:$0xe] %vm559, %v554
      %vm561 = vcmask 486432
      %562 = vst.msk [vmem:[#allocation2 + $0x4] sm:$0xf] %vm561, %v556
      %v563 = vld [vmem:[#allocation2] sm:$0xf]
      %v564 = vld [vmem:[#allocation2 + $0x4] sm:$0xf]
      %v565 = vld [vmem:[%s4] sm:$0xf]
      %v566 = vld [vmem:[%s4 + $0x4] sm:$0xf]
      %v567 = vld [vmem:[%s4 + $0x8] sm:$0xf]
      %v568 = vld [vmem:[%s4 + $0xc] sm:$0xf]
      %v569 = vld [vmem:[%s4 + $0x10] sm:$0xf]
      %v570 = vld [vmem:[%s4 + $0x14] sm:$0xf]
      %v571 = vld [vmem:[%s4 + $0x18] sm:$0xf]
      %v572 = vld [vmem:[%s4 + $0x1c] sm:$0xf]
      %v573 = vld [vmem:[#allocation2 + $0x8] sm:$0x1]
      %s574 = scalar_lea.vmem %s4, 32
      %v575 = vld [vmem:[%s574] sm:$0xf]
      %v576 = vld [vmem:[%s574 + $0x4] sm:$0xf]
      %v577 = vld [vmem:[%s574 + $0x8] sm:$0xf]
      %v578 = vld [vmem:[%s574 + $0xc] sm:$0xf]
      %v579 = vld [vmem:[%s574 + $0x10] sm:$0xf]
      %v580 = vld [vmem:[%s574 + $0x14] sm:$0xf]
      %v581 = vld [vmem:[%s574 + $0x18] sm:$0xf]
      %v582 = vld [vmem:[%s574 + $0x1c] sm:$0xf]
      %v586 = vunpack.c.l.b16 %v563
      %v587 = vunpack.c.l.b16 %v564
      %v588 = vunpack.c.l.b16 %v573
      %v589 = vpack.c.b16 %v587, %v586
      %v590 = vpack.c.b16 %v588, %v588
      %vm591 = vsmask.f32 7424
      %v593 = vshrl.u32 %v589, 16
      %v595 = vshll.u32 %v589, 16
      %v597 = vrot.slane %v595, 1
      %v598 = vor.u32 %v593, %v597
      %v600 = vshll.u32 %v590, 16
      %v602 = vrot.slane %v600, 1
      %v603 = vsel %vm591, %v598, %v602
      %v612 = vunpack.c.l.b16 %v575
      %v613 = vunpack.c.l.b16 %v576
      %v614 = vunpack.c.l.b16 %v577
      %v615 = vunpack.c.l.b16 %v578
      %v616 = vunpack.c.l.b16 %v579
      %v617 = vunpack.c.l.b16 %v580
      %v618 = vunpack.c.l.b16 %v581
      %v619 = vunpack.c.l.b16 %v582
      %v620 = vpack.c.b16 %v613, %v612
      %v621 = vpack.c.b16 %v615, %v614
      %v622 = vpack.c.b16 %v617, %v616
      %v623 = vpack.c.b16 %v619, %v618
      %vm628 = vcmask 523264
      %v630 = vsel %vm628, %v603, 0
      %632 = vmatpush.bf16.msra.mxu0 0
      %633 = vmatpush.bf16.msra.mxu0 0
      %634 = vmatpush.bf16.msra.mxu0 0
      %635 = vmatpush.bf16.msra.mxu0 0
      %636 = vmatpush.bf16.msra.mxu0 %v623
      %637 = vmatpush.bf16.msra.mxu0 %v622
      %638 = vmatpush.bf16.msra.mxu0 %v621
      %639 = vmatpush.bf16.msra.mxu0 %v620
      %640 = vmatmul.bf16.gmra.mxu0 %v630
      %v641 = vpop.f32.mrf.mxu0
      %v642 = vadd.f32 0.0, %v641
      %v643 = vpop.f32.mrf.mxu0
      %v644 = vadd.f32 0.0, %v643
      %645 = vdwg.mxu0
      %v654 = vunpack.c.l.b16 %v565
      %v655 = vunpack.c.l.b16 %v566
      %v656 = vunpack.c.l.b16 %v567
      %v657 = vunpack.c.l.b16 %v568
      %v658 = vunpack.c.l.b16 %v569
      %v659 = vunpack.c.l.b16 %v570
      %v660 = vunpack.c.l.b16 %v571
      %v661 = vunpack.c.l.b16 %v572
      %v662 = vpack.c.b16 %v655, %v654
      %v663 = vpack.c.b16 %v657, %v656
      %v664 = vpack.c.b16 %v659, %v658
      %v665 = vpack.c.b16 %v661, %v660
      %v670 = vsel %vm628, %v589, 0
      %672 = vmatpush.bf16.msra.mxu0 0
      %673 = vmatpush.bf16.msra.mxu0 0
      %674 = vmatpush.bf16.msra.mxu0 0
      %675 = vmatpush.bf16.msra.mxu0 0
      %676 = vmatpush.bf16.msra.mxu0 %v665
      %677 = vmatpush.bf16.msra.mxu0 %v664
      %678 = vmatpush.bf16.msra.mxu0 %v663
      %679 = vmatpush.bf16.msra.mxu0 %v662
      %680 = vmatmul.bf16.gmra.mxu0 %v670
      %v681 = vpop.f32.mrf.mxu0
      %v682 = vadd.f32 %v642, %v681
      %v683 = vpop.f32.mrf.mxu0
      %v684 = vadd.f32 %v644, %v683
      %685 = vdwg.mxu0
      %v686 = vld [vmem:[#allocation2] sm:$0xe]
      %s687 = scalar_lea.vmem %s4, 64
      %v688 = vld [vmem:[%s687] sm:$0xf]
      %v689 = vld [vmem:[%s687 + $0x4] sm:$0xf]
      %v690 = vld [vmem:[%s687 + $0x8] sm:$0xf]
      %v691 = vld [vmem:[%s687 + $0xc] sm:$0xf]
      %v692 = vld [vmem:[%s687 + $0x10] sm:$0xf]
      %v693 = vld [vmem:[%s687 + $0x14] sm:$0xf]
      %v694 = vld [vmem:[%s687 + $0x18] sm:$0xf]
      %v695 = vld [vmem:[%s687 + $0x1c] sm:$0xf]
      %v697 = vunpack.c.l.b16 %v686
      %v698 = vpack.c.b16 %v587, %v697
      %vm699 = vcmask 1046528
      %v700 = vrot.slane %v698, 1
      %v701 = vrot.slane %v590, 1
      %v702 = vsel %vm699, %v700, %v701
      %v711 = vunpack.c.l.b16 %v688
      %v712 = vunpack.c.l.b16 %v689
      %v713 = vunpack.c.l.b16 %v690
      %v714 = vunpack.c.l.b16 %v691
      %v715 = vunpack.c.l.b16 %v692
      %v716 = vunpack.c.l.b16 %v693
      %v717 = vunpack.c.l.b16 %v694
      %v718 = vunpack.c.l.b16 %v695
      %v719 = vpack.c.b16 %v712, %v711
      %v720 = vpack.c.b16 %v714, %v713
      %v721 = vpack.c.b16 %v716, %v715
      %v722 = vpack.c.b16 %v718, %v717
      %v728 = vsel %vm628, %v702, 0
      %730 = vmatpush.bf16.msra.mxu0 0
      %731 = vmatpush.bf16.msra.mxu0 0
      %732 = vmatpush.bf16.msra.mxu0 0
      %733 = vmatpush.bf16.msra.mxu0 0
      %734 = vmatpush.bf16.msra.mxu0 %v722
      %735 = vmatpush.bf16.msra.mxu0 %v721
      %736 = vmatpush.bf16.msra.mxu0 %v720
      %737 = vmatpush.bf16.msra.mxu0 %v719
      %738 = vmatmul.bf16.gmra.mxu0 %v728
      %v739 = vpop.f32.mrf.mxu0
      %v740 = vadd.f32 0.0, %v739
      %v741 = vpop.f32.mrf.mxu0
      %v742 = vadd.f32 0.0, %v741
      %743 = vdwg.mxu0
      %v744 = vadd.f32 %v682, %v740
      %v745 = vadd.f32 %v684, %v742
      %v746 = vld [vmem:[#allocation3] sm:$0xf]
      %v747 = vld [vmem:[#allocation3 + $0x4] sm:$0xf]
      %v748 = vld [vmem:[%s5] sm:$0xf]
      %v749 = vld [vmem:[%s5 + $0x4] sm:$0xf]
      %v750 = vld [vmem:[%s5 + $0x8] sm:$0xf]
      %v751 = vld [vmem:[%s5 + $0xc] sm:$0xf]
      %v752 = vld [vmem:[%s5 + $0x10] sm:$0xf]
      %v753 = vld [vmem:[%s5 + $0x14] sm:$0xf]
      %v754 = vld [vmem:[%s5 + $0x18] sm:$0xf]
      %v755 = vld [vmem:[%s5 + $0x1c] sm:$0xf]
      %v756 = vld [vmem:[#allocation3 + $0x8] sm:$0x1]
      %s757 = scalar_lea.vmem %s5, 32
      %v758 = vld [vmem:[%s757] sm:$0xf]
      %v759 = vld [vmem:[%s757 + $0x4] sm:$0xf]
      %v760 = vld [vmem:[%s757 + $0x8] sm:$0xf]
      %v761 = vld [vmem:[%s757 + $0xc] sm:$0xf]
      %v762 = vld [vmem:[%s757 + $0x10] sm:$0xf]
      %v763 = vld [vmem:[%s757 + $0x14] sm:$0xf]
      %v764 = vld [vmem:[%s757 + $0x18] sm:$0xf]
      %v765 = vld [vmem:[%s757 + $0x1c] sm:$0xf]
      %v769 = vunpack.c.l.b16 %v746
      %v770 = vunpack.c.l.b16 %v747
      %v771 = vunpack.c.l.b16 %v756
      %v772 = vpack.c.b16 %v770, %v769
      %v773 = vpack.c.b16 %v771, %v771
      %v775 = vshrl.u32 %v772, 16
      %v777 = vshll.u32 %v772, 16
      %v779 = vrot.slane %v777, 1
      %v780 = vor.u32 %v775, %v779
      %v782 = vshll.u32 %v773, 16
      %v784 = vrot.slane %v782, 1
      %v785 = vsel %vm591, %v780, %v784
      %v794 = vunpack.c.l.b16 %v758
      %v795 = vunpack.c.l.b16 %v759
      %v796 = vunpack.c.l.b16 %v760
      %v797 = vunpack.c.l.b16 %v761
      %v798 = vunpack.c.l.b16 %v762
      %v799 = vunpack.c.l.b16 %v763
      %v800 = vunpack.c.l.b16 %v764
      %v801 = vunpack.c.l.b16 %v765
      %v802 = vpack.c.b16 %v795, %v794
      %v803 = vpack.c.b16 %v797, %v796
      %v804 = vpack.c.b16 %v799, %v798
      %v805 = vpack.c.b16 %v801, %v800
      %v811 = vsel %vm628, %v785, 0
      %813 = vmatpush.bf16.msra.mxu0 0
      %814 = vmatpush.bf16.msra.mxu0 0
      %815 = vmatpush.bf16.msra.mxu0 0
      %816 = vmatpush.bf16.msra.mxu0 0
      %817 = vmatpush.bf16.msra.mxu0 %v805
      %818 = vmatpush.bf16.msra.mxu0 %v804
      %819 = vmatpush.bf16.msra.mxu0 %v803
      %820 = vmatpush.bf16.msra.mxu0 %v802
      %821 = vmatmul.bf16.gmra.mxu0 %v811
      %v822 = vpop.f32.mrf.mxu0
      %v823 = vadd.f32 0.0, %v822
      %v824 = vpop.f32.mrf.mxu0
      %v825 = vadd.f32 0.0, %v824
      %826 = vdwg.mxu0
      %v835 = vunpack.c.l.b16 %v748
      %v836 = vunpack.c.l.b16 %v749
      %v837 = vunpack.c.l.b16 %v750
      %v838 = vunpack.c.l.b16 %v751
      %v839 = vunpack.c.l.b16 %v752
      %v840 = vunpack.c.l.b16 %v753
      %v841 = vunpack.c.l.b16 %v754
      %v842 = vunpack.c.l.b16 %v755
      %v843 = vpack.c.b16 %v836, %v835
      %v844 = vpack.c.b16 %v838, %v837
      %v845 = vpack.c.b16 %v840, %v839
      %v846 = vpack.c.b16 %v842, %v841
      %v851 = vsel %vm628, %v772, 0
      %853 = vmatpush.bf16.msra.mxu0 0
      %854 = vmatpush.bf16.msra.mxu0 0
      %855 = vmatpush.bf16.msra.mxu0 0
      %856 = vmatpush.bf16.msra.mxu0 0
      %857 = vmatpush.bf16.msra.mxu0 %v846
      %858 = vmatpush.bf16.msra.mxu0 %v845
      %859 = vmatpush.bf16.msra.mxu0 %v844
      %860 = vmatpush.bf16.msra.mxu0 %v843
      %861 = vmatmul.bf16.gmra.mxu0 %v851
      %v862 = vpop.f32.mrf.mxu0
      %v863 = vadd.f32 %v823, %v862
      %v864 = vpop.f32.mrf.mxu0
      %v865 = vadd.f32 %v825, %v864
      %866 = vdwg.mxu0
      %v867 = vld [vmem:[#allocation3] sm:$0xe]
      %s868 = scalar_lea.vmem %s5, 64
      %v869 = vld [vmem:[%s868] sm:$0xf]
      %v870 = vld [vmem:[%s868 + $0x4] sm:$0xf]
      %v871 = vld [vmem:[%s868 + $0x8] sm:$0xf]
      %v872 = vld [vmem:[%s868 + $0xc] sm:$0xf]
      %v873 = vld [vmem:[%s868 + $0x10] sm:$0xf]
      %v874 = vld [vmem:[%s868 + $0x14] sm:$0xf]
      %v875 = vld [vmem:[%s868 + $0x18] sm:$0xf]
      %v876 = vld [vmem:[%s868 + $0x1c] sm:$0xf]
      %v878 = vunpack.c.l.b16 %v867
      %v879 = vpack.c.b16 %v770, %v878
      %v880 = vrot.slane %v879, 1
      %v881 = vrot.slane %v773, 1
      %v882 = vsel %vm699, %v880, %v881
      %v891 = vunpack.c.l.b16 %v869
      %v892 = vunpack.c.l.b16 %v870
      %v893 = vunpack.c.l.b16 %v871
      %v894 = vunpack.c.l.b16 %v872
      %v895 = vunpack.c.l.b16 %v873
      %v896 = vunpack.c.l.b16 %v874
      %v897 = vunpack.c.l.b16 %v875
      %v898 = vunpack.c.l.b16 %v876
      %v899 = vpack.c.b16 %v892, %v891
      %v900 = vpack.c.b16 %v894, %v893
      %v901 = vpack.c.b16 %v896, %v895
      %v902 = vpack.c.b16 %v898, %v897
      %v908 = vsel %vm628, %v882, 0
      %910 = vmatpush.bf16.msra.mxu0 0
      %911 = vmatpush.bf16.msra.mxu0 0
      %912 = vmatpush.bf16.msra.mxu0 0
      %913 = vmatpush.bf16.msra.mxu0 0
      %914 = vmatpush.bf16.msra.mxu0 %v902
      %915 = vmatpush.bf16.msra.mxu0 %v901
      %916 = vmatpush.bf16.msra.mxu0 %v900
      %917 = vmatpush.bf16.msra.mxu0 %v899
      %918 = vmatmul.bf16.gmra.mxu0 %v908
      %v919 = vpop.f32.mrf.mxu0
      %v920 = vadd.f32 0.0, %v919
      %v921 = vpop.f32.mrf.mxu0
      %v922 = vadd.f32 0.0, %v921
      %923 = vdwg.mxu0
      %v924 = vadd.f32 %v863, %v920
      %v925 = vadd.f32 %v865, %v922
      %v926 = vadd.f32 %v744, %v924
      %v927 = vadd.f32 %v745, %v925
      %v928 = vld [vmem:[%s6] sm:$0x1]
      %v930 = vperm.slane %v928, 0
      %v932 = vadd.f32 %v926, %v930
      %v933 = vadd.f32 %v927, %v930
      %v934 = vmax.f32 %v932, 0.0
      %v935 = vmax.f32 %v933, 0.0
      %v936 = vld [vmem:[#allocation4] sm:$0x1]
      %v937 = vsel %vm489, 0, %v936
      %938 = vst [vmem:[#allocation4] sm:$0x1] %v937
      %v939 = vld [vmem:[#allocation4 + $0x8] sm:$0x1]
      %v940 = vsel %vm494, 0, %v939
      %941 = vst [vmem:[#allocation4 + $0x8] sm:$0x1] %v940
      %v942 = vpack.c.bf16 %v934, %v934
      %v943 = vpack.c.bf16 %v935, %v935
      %v945 = vshrl.u32 %v942, 16
      %v947 = vrot.slane %v945, 7
      %v948 = vshll.u32 %v942, 16
      %v950 = vor.u32 %v947, %v948
      %v951 = vrot.slane %v947, 4
      %v953 = vshrl.u32 %v943, 16
      %v955 = vrot.slane %v953, 7
      %v956 = vshll.u32 %v943, 16
      %v958 = vor.u32 %v955, %v956
      %v959 = vsel %vm501, %v951, %v958
      %v960 = vrot.slane %v955, 4
      %v964 = vld [vmem:[#allocation4] sm:$0xf]
      %v965 = vsel %vm529, %v950, %v964
      %966 = vst [vmem:[#allocation4] sm:$0xf] %v965
      %967 = vst.msk [vmem:[#allocation4 + $0x4] sm:$0xf] %vm533, %v959
      %v968 = vld [vmem:[#allocation4 + $0x8] sm:$0x1]
      %v969 = vsel %vm489, %v960, %v968
      %970 = vst [vmem:[#allocation4 + $0x8] sm:$0x1] %v969
      %v971 = vld [vmem:[#allocation4] sm:$0xf]
      %v972 = vld [vmem:[#allocation4 + $0x4] sm:$0xf]
      %v973 = vld [vmem:[%s7] sm:$0xf]
      %v974 = vld [vmem:[%s7 + $0x4] sm:$0xf]
      %v975 = vld [vmem:[%s7 + $0x8] sm:$0xf]
      %v976 = vld [vmem:[%s7 + $0xc] sm:$0xf]
      %v977 = vld [vmem:[%s7 + $0x10] sm:$0xf]
      %v978 = vld [vmem:[%s7 + $0x14] sm:$0xf]
      %v979 = vld [vmem:[%s7 + $0x18] sm:$0xf]
      %v980 = vld [vmem:[%s7 + $0x1c] sm:$0xf]
      %v981 = vld [vmem:[#allocation4 + $0x8] sm:$0x1]
      %s982 = scalar_lea.vmem %s7, 32
      %v983 = vld [vmem:[%s982] sm:$0xf]
      %v984 = vld [vmem:[%s982 + $0x4] sm:$0xf]
      %v985 = vld [vmem:[%s982 + $0x8] sm:$0xf]
      %v986 = vld [vmem:[%s982 + $0xc] sm:$0xf]
      %v987 = vld [vmem:[%s982 + $0x10] sm:$0xf]
      %v988 = vld [vmem:[%s982 + $0x14] sm:$0xf]
      %v989 = vld [vmem:[%s982 + $0x18] sm:$0xf]
      %v990 = vld [vmem:[%s982 + $0x1c] sm:$0xf]
      %v994 = vunpack.c.l.b16 %v971
      %v995 = vunpack.c.l.b16 %v972
      %v996 = vunpack.c.l.b16 %v981
      %v997 = vpack.c.b16 %v995, %v994
      %v998 = vpack.c.b16 %v996, %v996
      %v1000 = vshrl.u32 %v997, 16
      %v1002 = vshll.u32 %v997, 16
      %v1004 = vrot.slane %v1002, 1
      %v1005 = vor.u32 %v1000, %v1004
      %v1007 = vshll.u32 %v998, 16
      %v1009 = vrot.slane %v1007, 1
      %v1010 = vsel %vm591, %v1005, %v1009
      %v1019 = vunpack.c.l.b16 %v983
      %v1020 = vunpack.c.l.b16 %v984
      %v1021 = vunpack.c.l.b16 %v985
      %v1022 = vunpack.c.l.b16 %v986
      %v1023 = vunpack.c.l.b16 %v987
      %v1024 = vunpack.c.l.b16 %v988
      %v1025 = vunpack.c.l.b16 %v989
      %v1026 = vunpack.c.l.b16 %v990
      %v1027 = vpack.c.b16 %v1020, %v1019
      %v1028 = vpack.c.b16 %v1022, %v1021
      %v1029 = vpack.c.b16 %v1024, %v1023
      %v1030 = vpack.c.b16 %v1026, %v1025
      %v1036 = vsel %vm628, %v1010, 0
      %1038 = vmatpush.bf16.msra.mxu0 0
      %1039 = vmatpush.bf16.msra.mxu0 0
      %1040 = vmatpush.bf16.msra.mxu0 0
      %1041 = vmatpush.bf16.msra.mxu0 0
      %1042 = vmatpush.bf16.msra.mxu0 %v1030
      %1043 = vmatpush.bf16.msra.mxu0 %v1029
      %1044 = vmatpush.bf16.msra.mxu0 %v1028
      %1045 = vmatpush.bf16.msra.mxu0 %v1027
      %1046 = vmatmul.bf16.gmra.mxu0 %v1036
      %v1047 = vpop.f32.mrf.mxu0
      %v1048 = vadd.f32 0.0, %v1047
      %v1049 = vpop.f32.mrf.mxu0
      %v1050 = vadd.f32 0.0, %v1049
      %1051 = vdwg.mxu0
      %v1060 = vunpack.c.l.b16 %v973
      %v1061 = vunpack.c.l.b16 %v974
      %v1062 = vunpack.c.l.b16 %v975
      %v1063 = vunpack.c.l.b16 %v976
      %v1064 = vunpack.c.l.b16 %v977
      %v1065 = vunpack.c.l.b16 %v978
      %v1066 = vunpack.c.l.b16 %v979
      %v1067 = vunpack.c.l.b16 %v980
      %v1068 = vpack.c.b16 %v1061, %v1060
      %v1069 = vpack.c.b16 %v1063, %v1062
      %v1070 = vpack.c.b16 %v1065, %v1064
      %v1071 = vpack.c.b16 %v1067, %v1066
      %v1076 = vsel %vm628, %v997, 0
      %1078 = vmatpush.bf16.msra.mxu0 0
      %1079 = vmatpush.bf16.msra.mxu0 0
      %1080 = vmatpush.bf16.msra.mxu0 0
      %1081 = vmatpush.bf16.msra.mxu0 0
      %1082 = vmatpush.bf16.msra.mxu0 %v1071
      %1083 = vmatpush.bf16.msra.mxu0 %v1070
      %1084 = vmatpush.bf16.msra.mxu0 %v1069
      %1085 = vmatpush.bf16.msra.mxu0 %v1068
      %1086 = vmatmul.bf16.gmra.mxu0 %v1076
      %v1087 = vpop.f32.mrf.mxu0
      %v1088 = vadd.f32 %v1048, %v1087
      %v1089 = vpop.f32.mrf.mxu0
      %v1090 = vadd.f32 %v1050, %v1089
      %1091 = vdwg.mxu0
      %v1092 = vld [vmem:[#allocation4] sm:$0xe]
      %s1093 = scalar_lea.vmem %s7, 64
      %v1094 = vld [vmem:[%s1093] sm:$0xf]
      %v1095 = vld [vmem:[%s1093 + $0x4] sm:$0xf]
      %v1096 = vld [vmem:[%s1093 + $0x8] sm:$0xf]
      %v1097 = vld [vmem:[%s1093 + $0xc] sm:$0xf]
      %v1098 = vld [vmem:[%s1093 + $0x10] sm:$0xf]
      %v1099 = vld [vmem:[%s1093 + $0x14] sm:$0xf]
      %v1100 = vld [vmem:[%s1093 + $0x18] sm:$0xf]
      %v1101 = vld [vmem:[%s1093 + $0x1c] sm:$0xf]
      %v1103 = vunpack.c.l.b16 %v1092
      %v1104 = vpack.c.b16 %v995, %v1103
      %v1105 = vrot.slane %v1104, 1
      %v1106 = vrot.slane %v998, 1
      %v1107 = vsel %vm699, %v1105, %v1106
      %v1116 = vunpack.c.l.b16 %v1094
      %v1117 = vunpack.c.l.b16 %v1095
      %v1118 = vunpack.c.l.b16 %v1096
      %v1119 = vunpack.c.l.b16 %v1097
      %v1120 = vunpack.c.l.b16 %v1098
      %v1121 = vunpack.c.l.b16 %v1099
      %v1122 = vunpack.c.l.b16 %v1100
      %v1123 = vunpack.c.l.b16 %v1101
      %v1124 = vpack.c.b16 %v1117, %v1116
      %v1125 = vpack.c.b16 %v1119, %v1118
      %v1126 = vpack.c.b16 %v1121, %v1120
      %v1127 = vpack.c.b16 %v1123, %v1122
      %v1133 = vsel %vm628, %v1107, 0
      %1135 = vmatpush.bf16.msra.mxu0 0
      %1136 = vmatpush.bf16.msra.mxu0 0
      %1137 = vmatpush.bf16.msra.mxu0 0
      %1138 = vmatpush.bf16.msra.mxu0 0
      %1139 = vmatpush.bf16.msra.mxu0 %v1127
      %1140 = vmatpush.bf16.msra.mxu0 %v1126
      %1141 = vmatpush.bf16.msra.mxu0 %v1125
      %1142 = vmatpush.bf16.msra.mxu0 %v1124
      %1143 = vmatmul.bf16.gmra.mxu0 %v1133
      %v1144 = vpop.f32.mrf.mxu0
      %v1145 = vadd.f32 0.0, %v1144
      %v1146 = vpop.f32.mrf.mxu0
      %v1147 = vadd.f32 0.0, %v1146
      %1148 = vdwg.mxu0
      %v1149 = vadd.f32 %v1088, %v1145
      %v1150 = vadd.f32 %v1090, %v1147
      %v1151 = vld [vmem:[%s8] sm:$0x1]
      %v1153 = vperm.slane %v1151, 0
      %v1155 = vadd.f32 %v1149, %v1153
      %v1156 = vadd.f32 %v1150, %v1153
      %v1157 = vmax.f32 %v1155, 0.0
      %v1158 = vmax.f32 %v1156, 0.0
      %1159 = vst.msk [vmem:[%s352] sm:$0xff] %vm628, %v1157
      %1160 = vst.msk [vmem:[%s352 + $0x8] sm:$0xff] %vm628, %v1158
      %p1161 = scmp.lt.s32.totalorder %s20, 1
      %s1162 = scalar_select %p1161, %s20, 1
      %s1163 = smul.addr %s1162, 2
      %s1164 = smul.addr %s1163, 8
      %s1165 = scalar_lea.vmem %s9, %s1164
      // Predicated region
      $region57: #{unet_up_c_forward.1} parent=55 // pred_check
        %p1166 = pneg %p237
      $region58: #{unet_up_c_forward.1} parent=55 // pred_check_branch
        %1168 = sbr.rel (%p1166) target = $region60
      $region59: #{unet_up_c_forward.1} parent=55 // pred_region
        _
      $region60: #{unet_up_c_forward.1} parent=55 // pred_fallthru
        _
    $region56: #{unet_up_c_forward.1} parent=5 // pred_fallthru
      _
    %p1169 = scmp.le.s32.totalorder 2, %s15
    // Predicated region
    $region61: #{unet_up_c_forward.1} parent=5 // pred_check
      %p1170 = pneg %p1169
    $region62: #{unet_up_c_forward.1} parent=5 // pred_check_branch
      %1172 = sbr.rel (%p1170) target = $region64
    $region63: #{unet_up_c_forward.1} parent=5 // pred_region
      %s1173 = ssub.s32 %s15, 2
      // Predicated region
      $region65: #{unet_up_c_forward.1} parent=63 // pred_check
        %p1174 = pneg %p243
      $region66: #{unet_up_c_forward.1} parent=63 // pred_check_branch
        %1176 = sbr.rel (%p1174) target = $region68
      $region67: #{unet_up_c_forward.1} parent=63 // pred_region
        %p1177 = scmp.lt.s32.totalorder %s21, 1
        %s1178 = scalar_select %p1177, %s21, 1
        %s1179 = smul.addr %s1178, 2
        %s1180 = smul.addr %s1179, 8
        %s1181 = scalar_lea.vmem %s9, %s1180
      $region68: #{unet_up_c_forward.1} parent=63 // pred_fallthru
        _
    $region64: #{unet_up_c_forward.1} parent=5 // pred_fallthru
      _
  $region6: #{unet_up_c_forward.1} parent=0 // loop_footer
    %s19 = sadd.s32 1, %s15
  $region7: #{unet_up_c_forward.1} parent=0 // loop_footer_branch
    %14 = sbr.rel target = $region3
  $region8: #{unet_up_c_forward.1} parent=0 // loop_exit
    _

</llo_original>
